<compile_context>
chip_gen: v7x
topology: tpu7x:2x2x1
jax: 0.10.0
libtpu: 0.0.40
codegen_flags: <defaults>
</compile_context>

<pallas_src>
import numpy as np
import jax
import jax.numpy as jnp
from jax.experimental import pallas as pl
from jax.experimental.pallas import tpu as pltpu


# ----------------------------------------------------------------------------
# Parameter init (mirrors kkpthlib Conv2d: ortho weight init, zero biases)
# ----------------------------------------------------------------------------
def np_ortho_conv(num_feature_maps, input_channels, kh, kw, random_state, scale=1.0):
    # matches np_ortho for tuple-shape input: shp = (num_feature_maps, C, KH, KW)
    shp = (num_feature_maps, input_channels, kh, kw)
    flat_shp = (shp[0], int(np.prod(shp[1:])))
    g = random_state.randn(*flat_shp)
    U, S, VT = np.linalg.svd(g, full_matrices=False)
    res = U if U.shape == flat_shp else VT
    res = res.reshape(shp)
    return (scale * res).astype("float32")


def make_conv2d_params(list_of_input_dims, num_feature_maps, kernel_size, random_state):
    input_channels = sum(list_of_input_dims)
    kh, kw = kernel_size
    # make_numpy_weights -> np_ortho gives (O, C, KH, KW); the module's two transposes
    # (2,3,1,0) then (3,2,0,1) round-trip back to OIHW, so the effective PyTorch weight
    # is exactly this tensor.
    weight_oihw = np_ortho_conv(num_feature_maps, input_channels, kh, kw, random_state)
    bias = np.zeros((num_feature_maps,), dtype="float32")  # make_numpy_biases + 0.0 offset
    return jnp.asarray(weight_oihw), jnp.asarray(bias)


# ----------------------------------------------------------------------------
# Pallas kernel: "same"-padded conv, stride 1, dilation 1, fused im2col matmul
# ----------------------------------------------------------------------------
def _pick_row_tile(Ho, Wo, Wp, C, KH, OP, in_bytes, budget_bytes=12 * 1024 * 1024):
    """Largest row-tile height th (divisor of Ho) whose per-step double-buffered
    in/out VMEM footprint fits within `budget_bytes`.

    Bigger tiles amortize per-grid-step overhead and give the MXU a bigger M dim;
    the budget keeps us safely inside the scoped VMEM limit (32 MiB default here,
    important on v7x where physical VMEM is 64 MiB/TC)."""
    def footprint(th):
        inp = (th + KH - 1) * Wp * C * in_bytes          # halo'd input tile
        out = th * Wo * OP * 4                           # f32 output tile
        return 2 * (inp + out)                           # double-buffered by BlockSpec
    divs = [d for d in range(1, Ho + 1) if Ho % d == 0]
    fitting = [d for d in divs if footprint(d) <= budget_bytes]
    return max(fitting) if fitting else 1


def _make_conv2d_kernel(KH, KW, TH, Wo, C, OP):
    KKC = KH * KW * C

    def kernel(x_ref, w_ref, b_ref, o_ref):
        # x_ref: (TH + KH - 1, Wp, C)   halo'd input row tile (batch/tile dims squeezed)
        # w_ref: (KH*KW*C, OP)          flattened HWIO weight, O zero-padded to 128 lanes
        # b_ref: (1, OP)
        # o_ref: (TH, Wo, OP)           lane-dense output tile
        x = x_ref[...]
        # im2col: gather all KH*KW taps once and fuse them into a single MXU matmul
        # (one K=KH*KW*C push instead of KH*KW tiny K=C pushes + VALU accumulates).
        slabs = [x[kh:kh + TH, kw:kw + Wo, :] for kh in range(KH) for kw in range(KW)]
        patches = jnp.concatenate(slabs, axis=-1).reshape(TH * Wo, KKC)
        acc = jnp.dot(patches, w_ref[...], preferred_element_type=jnp.float32)
        acc = acc + b_ref[...]                       # (TH*Wo, OP) + (1, OP), f32
        o_ref[...] = acc.reshape(TH, Wo, OP).astype(o_ref.dtype)

    return kernel


def conv2d_forward(list_of_inputs, weight_oihw, bias, kernel_size=(3, 3),
                   compute_dtype=jnp.float32):
    """Replicates kkpthlib Conv2d.forward with border_mode='same', stride 1, dilation 1.

    list_of_inputs: list of NCHW arrays, concatenated along the last dim (width),
                    exactly like `torch.cat(list_of_inputs, dim=-1)` in the module.
    compute_dtype: set to jnp.bfloat16 on v6e/v7x for the MXU fast path (accumulation
                   stays f32); default f32 preserves the module's numerics exactly.
    Returns NCHW output (float32).
    """
    x = jnp.concatenate(list_of_inputs, axis=-1)  # NCHW
    N, C, H, W = x.shape
    O, Cw, KH, KW = weight_oihw.shape
    assert (KH, KW) == tuple(kernel_size) and Cw == C

    # pad_same with stride=1, dilation=1 -> padding_before = (ks-1)//2, applied
    # symmetrically (matches the module / F.conv2d; exact 'same' only for odd kernels).
    ph = (KH - 1) // 2
    pw = (KW - 1) // 2

    # TODO(synk): the NCHW->NHWC transpose + pad + row-tiling below is an extra XLA
    # pass over the activations in HBM; accepting NHWC activations upstream (or folding
    # the zero pad into the kernel with border masking) would remove it entirely.
    x_nhwc = jnp.transpose(x, (0, 2, 3, 1))
    x_pad = jnp.pad(x_nhwc, ((0, 0), (ph, ph), (pw, pw), (0, 0)))
    Hp, Wp = H + 2 * ph, W + 2 * pw
    Ho, Wo = Hp - KH + 1, Wp - KW + 1

    # Lane-dense weight / bias / output: pad O up to a multiple of 128 so output stores
    # are full-width vst (not masked vst.msk on a few lanes). Sliced back after the call.
    OP = ((O + 127) // 128) * 128
    in_bytes = jnp.dtype(compute_dtype).itemsize

    # Row tiling: each grid step computes `th` output rows from a halo'd input tile of
    # th + KH - 1 rows. Halo rows are duplicated wrapper-side so every BlockSpec stays a
    # plain blocked index_map (no overlapping windows).
    th = _pick_row_tile(Ho, Wo, Wp, C, KH, OP, in_bytes)
    n_rt = Ho // th
    thh = th + KH - 1
    if n_rt == 1:
        x_tiles = x_pad[:, None].astype(compute_dtype)           # (N, 1, Hp, Wp, C)
    else:
        x_tiles = jnp.stack([x_pad[:, r * th:r * th + thh] for r in range(n_rt)],
                            axis=1).astype(compute_dtype)        # (N, n_rt, thh, Wp, C)

    w_flat = jnp.transpose(weight_oihw, (2, 3, 1, 0)).reshape(KH * KW * C, O)  # HWIO flat
    w_flat = jnp.pad(w_flat, ((0, 0), (0, OP - O))).astype(compute_dtype)
    b_pad = jnp.pad(bias.astype(jnp.float32), (0, OP - O)).reshape(1, OP)

    kernel = _make_conv2d_kernel(KH, KW, th, Wo, C, OP)

    out_nhwc = pl.pallas_call(
        kernel,
        out_shape=jax.ShapeDtypeStruct((N, Ho, Wo, OP), jnp.float32),
        grid_spec=pltpu.PrefetchScalarGridSpec(
            num_scalar_prefetch=0,
            grid=(N, n_rt),
            in_specs=[
                pl.BlockSpec((None, None, thh, Wp, C), lambda n, r: (n, r, 0, 0, 0)),
                pl.BlockSpec((KH * KW * C, OP), lambda n, r: (0, 0)),
                pl.BlockSpec((1, OP), lambda n, r: (0, 0)),
            ],
            out_specs=pl.BlockSpec((None, th, Wo, OP), lambda n, r: (n, r, 0, 0)),
        ),
        compiler_params=pltpu.CompilerParams(
            dimension_semantics=("parallel", "parallel"),
            vmem_limit_bytes=32 * 1024 * 1024),
    )(x_tiles, w_flat, b_pad)

    out_nhwc = out_nhwc[..., :O]                 # drop the zero-padded output channels
    return jnp.transpose(out_nhwc, (0, 3, 1, 2))  # back to PyTorch NCHW convention


if __name__ == "__main__":
    # Small shapes consistent with the module: batch=2, channels=4, spatial=16x16,
    # num_feature_maps=8, kernel 3x3, border_mode='same'.
    list_of_input_dims = [4]
    num_feature_maps = 8
    kernel_size = (3, 3)

    rs = np.random.RandomState(1234)  # deterministic ortho init, as in the module
    weight, bias = make_conv2d_params(list_of_input_dims, num_feature_maps,
                                      kernel_size, rs)

    key = jax.random.PRNGKey(0)
    x = jax.random.normal(key, (2, 4, 16, 16), dtype=jnp.float32)  # NCHW

    out = conv2d_forward([x], weight, bias, kernel_size=kernel_size)
    out = jax.block_until_ready(out)

    # sanity check against plain-JAX reference conv (same padding semantics as module)
    ref = jax.lax.conv_general_dilated(
        x, weight, window_strides=(1, 1), padding=((1, 1), (1, 1)),
        dimension_numbers=("NCHW", "OIHW", "NCHW")) + bias.reshape(1, -1, 1, 1)
    assert out.shape == (2, num_feature_maps, 16, 16)
    np.testing.assert_allclose(np.asarray(out), np.asarray(ref), rtol=1e-5, atol=1e-5)

    print("KERNEL_OK")
</pallas_src>

<mosaic_0001>
module attributes {stable_mosaic.version = 11 : i64} {
  func.func @kernel(%arg0: i32, %arg1: i32, %arg2: memref<1x1x18x18x4xf32, #tpu.memory_space<vmem>>, %arg3: memref<36x128xf32, #tpu.memory_space<vmem>>, %arg4: memref<1x128xf32, #tpu.memory_space<vmem>>, %arg5: memref<1x16x16x128xf32, #tpu.memory_space<vmem>>) attributes {dimension_semantics = [#tpu.dimension_semantics<parallel>, #tpu.dimension_semantics<parallel>], iteration_bounds = array<i64: 2, 1>, scalar_prefetch = 0 : i64, scratch_operands = 0 : i64, tpu.core_type = #tpu.core_type<tc>, window_params = [{transform_indices = @transform_0, window_bounds = array<i64: 1, 1, 18, 18, 4>}, {pipeline_mode = #tpu.pipeline_mode<synchronous>, transform_indices = @transform_1, window_bounds = array<i64: 36, 128>}, {pipeline_mode = #tpu.pipeline_mode<synchronous>, transform_indices = @transform_2, window_bounds = array<i64: 1, 128>}, {transform_indices = @transform_3, window_bounds = array<i64: 1, 16, 16, 128>}]} {
    %c0 = arith.constant 0 : index
    %c0_0 = arith.constant 0 : index
    %c0_1 = arith.constant 0 : index
    %c0_2 = arith.constant 0 : index
    %c0_3 = arith.constant 0 : index
    %0 = vector.load %arg2[%c0, %c0_0, %c0_1, %c0_2, %c0_3] : memref<1x1x18x18x4xf32, #tpu.memory_space<vmem>>, vector<1x1x18x18x4xf32>
    %1 = vector.shape_cast %0 : vector<1x1x18x18x4xf32> to vector<18x18x4xf32>
    %2 = vector.extract_strided_slice %1 {offsets = [0, 0, 0], sizes = [16, 16, 4], strides = [1, 1, 1]} : vector<18x18x4xf32> to vector<16x16x4xf32>
    %3 = vector.extract_strided_slice %1 {offsets = [0, 1, 0], sizes = [16, 16, 4], strides = [1, 1, 1]} : vector<18x18x4xf32> to vector<16x16x4xf32>
    %4 = vector.extract_strided_slice %1 {offsets = [0, 2, 0], sizes = [16, 16, 4], strides = [1, 1, 1]} : vector<18x18x4xf32> to vector<16x16x4xf32>
    %5 = vector.extract_strided_slice %1 {offsets = [1, 0, 0], sizes = [16, 16, 4], strides = [1, 1, 1]} : vector<18x18x4xf32> to vector<16x16x4xf32>
    %6 = vector.extract_strided_slice %1 {offsets = [1, 1, 0], sizes = [16, 16, 4], strides = [1, 1, 1]} : vector<18x18x4xf32> to vector<16x16x4xf32>
    %7 = vector.extract_strided_slice %1 {offsets = [1, 2, 0], sizes = [16, 16, 4], strides = [1, 1, 1]} : vector<18x18x4xf32> to vector<16x16x4xf32>
    %8 = vector.extract_strided_slice %1 {offsets = [2, 0, 0], sizes = [16, 16, 4], strides = [1, 1, 1]} : vector<18x18x4xf32> to vector<16x16x4xf32>
    %9 = vector.extract_strided_slice %1 {offsets = [2, 1, 0], sizes = [16, 16, 4], strides = [1, 1, 1]} : vector<18x18x4xf32> to vector<16x16x4xf32>
    %10 = vector.extract_strided_slice %1 {offsets = [2, 2, 0], sizes = [16, 16, 4], strides = [1, 1, 1]} : vector<18x18x4xf32> to vector<16x16x4xf32>
    %11 = tpu.concatenate %2, %3, %4, %5, %6, %7, %8, %9, %10 in 2 : vector<16x16x4xf32>, vector<16x16x4xf32>, vector<16x16x4xf32>, vector<16x16x4xf32>, vector<16x16x4xf32>, vector<16x16x4xf32>, vector<16x16x4xf32>, vector<16x16x4xf32>, vector<16x16x4xf32> -> vector<16x16x36xf32>
    %12 = vector.shape_cast %11 : vector<16x16x36xf32> to vector<256x36xf32>
    %c0_4 = arith.constant 0 : index
    %c0_5 = arith.constant 0 : index
    %13 = vector.load %arg3[%c0_4, %c0_5] : memref<36x128xf32, #tpu.memory_space<vmem>>, vector<36x128xf32>
    %cst = arith.constant dense<0.000000e+00> : vector<256x128xf32>
    %14 = tpu.matmul %12, %13, %cst {dimension_numbers = #tpu.dot_dimension_numbers<[1], [0], [0], [1], [0, 0, 1, 1], [], []>} : vector<256x36xf32>, vector<36x128xf32>, vector<256x128xf32> -> vector<256x128xf32>
    %c0_6 = arith.constant 0 : index
    %c0_7 = arith.constant 0 : index
    %15 = vector.load %arg4[%c0_6, %c0_7] : memref<1x128xf32, #tpu.memory_space<vmem>>, vector<1x128xf32>
    %16 = vector.broadcast %15 : vector<1x128xf32> to vector<256x128xf32>
    %17 = arith.addf %14, %16 : vector<256x128xf32>
    %18 = vector.shape_cast %17 : vector<256x128xf32> to vector<16x16x128xf32>
    %c0_8 = arith.constant 0 : index
    %c0_9 = arith.constant 0 : index
    %c0_10 = arith.constant 0 : index
    %c0_11 = arith.constant 0 : index
    %19 = vector.load %arg5[%c0_8, %c0_9, %c0_10, %c0_11] : memref<1x16x16x128xf32, #tpu.memory_space<vmem>>, vector<1x16x16x128xf32>
    %20 = vector.shape_cast %19 : vector<1x16x16x128xf32> to vector<16x16x128xf32>
    %21 = vector.shape_cast %18 : vector<16x16x128xf32> to vector<1x16x16x128xf32>
    tpu.vector_store %arg5[%c0_8, %c0_9, %c0_10, %c0_11], %21 {strides = array<i32>} : memref<1x16x16x128xf32, #tpu.memory_space<vmem>>, vector<1x16x16x128xf32>,
    return
  }
  func.func @transform_0(%arg0: i32, %arg1: i32) -> (i32, i32, i32, i32, i32) {
    %c0_i32 = arith.constant 0 : i32
    %c0_i32_0 = arith.constant 0 : i32
    %c0_i32_1 = arith.constant 0 : i32
    %c0_i32_2 = arith.constant 0 : i32
    return %arg0, %arg1, %c0_i32, %c0_i32_0, %c0_i32_1 : i32, i32, i32, i32, i32
  }
  func.func @transform_1(%arg0: i32, %arg1: i32) -> (i32, i32) {
    %c0_i32 = arith.constant 0 : i32
    %c0_i32_0 = arith.constant 0 : i32
    %c0_i32_1 = arith.constant 0 : i32
    return %c0_i32, %c0_i32_0 : i32, i32
  }
  func.func @transform_2(%arg0: i32, %arg1: i32) -> (i32, i32) {
    %c0_i32 = arith.constant 0 : i32
    %c0_i32_0 = arith.constant 0 : i32
    %c0_i32_1 = arith.constant 0 : i32
    return %c0_i32, %c0_i32_0 : i32, i32
  }
  func.func @transform_3(%arg0: i32, %arg1: i32) -> (i32, i32, i32, i32) {
    %c0_i32 = arith.constant 0 : i32
    %c0_i32_0 = arith.constant 0 : i32
    %c0_i32_1 = arith.constant 0 : i32
    return %arg0, %arg1, %c0_i32, %c0_i32_0 : i32, i32, i32, i32
  }
}

</mosaic_0001>

<llo_original>
// kernel: tpu_custom_call.1
$region0: #{tpu_custom_call.1}
  #allocation0 [shape = 'u32[]', space=smem, size = 0x4, offset = 0x4, fixed_abs, tag = 'smem constant byte address 0x4 - core index']
  #allocation1 [shape = 'u32[144,128]{1,0:T(1,128)}', space=vmem, size = 0x12000, scoped, tag = 'internal scratch']
  %s0 = inlined_call_operand.vmem [shape: f32[2,1,18,18,4], index: 0, kind: input, shape index: {}]
  %s1 = inlined_call_operand.vmem [shape: f32[36,128], index: 1, kind: input, shape index: {}]
  %s2 = inlined_call_operand.vmem [shape: f32[1,128], index: 2, kind: input, shape index: {}]
  %s3 = inlined_call_operand.hbm [shape: f32[2,16,16,128], index: 3, kind: output, shape index: {}]
  %s4 = sld [smem:[#allocation0]]
  $region45: #{tpu_custom_call.1} parent=0
    _
  %s6 = ssub.s32 1, %s4
  %s7 = scalar_select 0, %s6, %s4
  $region1: #{tpu_custom_call.1} parent=0
    #allocation2 [shape = 'u8[262144]{0}', space=vmem, size = 0x40000, scoped, tag = 'output window, operand 0']
    #allocation3 [shape = 's32[2]{0}', space=sflag, size = 0x8, scoped, tag = 'scoped memory for tpu_custom_call.1']
    %8 = vsyncpa [#allocation3], 0
    %s9 = scalar_lea.sflag [#allocation3], 1
    %10 = vsyncpa %s9, 0
    loop: start=0, step=1, limit=4
    $region2: #{tpu_custom_call.1} parent=1 // loop_pre_header
      _
    $region3: #{tpu_custom_call.1} parent=1 // loop_header
      %s12 = sphi 0, %s16
      %p13 = scmp.ge.s32.totalorder %s12, 4
      %s19 = sphi 0, %s31
      %s20 = sphi 0, %s27
      %s21 = sphi 0, %s19
      %s22 = sphi 0, %s20
      %s23 = sphi 0, %s21
      %s24 = sphi 0, %s22
      %s36 = sphi 0, %s38
      %s39 = sphi 0, %s36
      %s40 = sphi 0, %s39
      %s56 = sphi 0, %s40
      %s60 = sphi 0, %s60
      %s62 = sphi 0, %s60
      %s63 = sphi 0, %s62
      %s77 = sphi 0, %s63
      %s81 = sphi 0, %s81
      %s83 = sphi 0, %s81
      %s84 = sphi 0, %s83
      %s98 = sphi 0, %s84
      %s106 = sphi 0, %s108
      %s109 = sphi 0, %s106
      %s110 = sphi 0, %s109
      %s126 = sphi 0, %s110
    $region4: #{tpu_custom_call.1} parent=1 // loop_header_branch
      %15 = sbr.rel (%p13) target = $region8
    $region5: #{tpu_custom_call.1} parent=1 // loop_body
      %s17 = ssub.s32 %s12, 1
      %s18 = ssub.s32 %s12, 2
      %s25 = sadd.s32 1, %s20
      %p26 = scmp.ge.s32.totalorder %s25, 1
      %s27 = scalar_select %p26, 0, %s25
      %s28 = sadd.s32 1, %s19
      %s29 = scalar_select %p26, %s28, %s19
      %p30 = scmp.ge.s32.totalorder %s29, 2
      %s31 = scalar_select %p30, 0, %s29
      %s32 = ssub.s32 %s19, %s31
      %s33 = ssub.s32 %s20, %s27
      %s34 = sor.u32 %s32, %s33
      %p35 = scmp.eq.s32.totalorder %s34, 0
      %s37 = sadd.s32 %s36, 1
      %s38 = scalar_select %p35, %s36, %s37
      %p41 = pneg %p35
      %p42 = scmp.eq.s32.totalorder %s12, 1
      %p43 = por %p41, %p42
      %p44 = scmp.ne.s32.totalorder %s36, %s39
      %p45 = scmp.eq.s32.totalorder %s12, 0
      %p46 = por %p44, %p45
      %p47 = scmp.ne.s32.totalorder %s36, %s39
      %p48 = scmp.eq.s32.totalorder %s17, 1
      %p49 = por %p47, %p48
      %p50 = scmp.ne.s32.totalorder %s39, %s40
      %p51 = scmp.eq.s32.totalorder %s17, 0
      %p52 = por %p50, %p51
      %p53 = scmp.ne.s32.totalorder %s39, %s40
      %p54 = scmp.eq.s32.totalorder %s18, 1
      %p55 = por %p53, %p54
      %p57 = scmp.ne.s32.totalorder %s40, %s56
      %p58 = scmp.eq.s32.totalorder %s18, 0
      %p59 = por %p57, %p58
      %s61 = sadd.s32 %s60, 1
      %p64 = scmp.eq.s32.totalorder %s12, 1
      %p65 = scmp.ne.s32.totalorder %s60, %s62
      %p66 = scmp.eq.s32.totalorder %s12, 0
      %p67 = por %p65, %p66
      %p68 = scmp.ne.s32.totalorder %s60, %s62
      %p69 = scmp.eq.s32.totalorder %s17, 1
      %p70 = por %p68, %p69
      %p71 = scmp.ne.s32.totalorder %s62, %s63
      %p72 = scmp.eq.s32.totalorder %s17, 0
      %p73 = por %p71, %p72
      %p74 = scmp.ne.s32.totalorder %s62, %s63
      %p75 = scmp.eq.s32.totalorder %s18, 1
      %p76 = por %p74, %p75
      %p78 = scmp.ne.s32.totalorder %s63, %s77
      %p79 = scmp.eq.s32.totalorder %s18, 0
      %p80 = por %p78, %p79
      %s82 = sadd.s32 %s81, 1
      %p85 = scmp.eq.s32.totalorder %s12, 1
      %p86 = scmp.ne.s32.totalorder %s81, %s83
      %p87 = scmp.eq.s32.totalorder %s12, 0
      %p88 = por %p86, %p87
      %p89 = scmp.ne.s32.totalorder %s81, %s83
      %p90 = scmp.eq.s32.totalorder %s17, 1
      %p91 = por %p89, %p90
      %p92 = scmp.ne.s32.totalorder %s83, %s84
      %p93 = scmp.eq.s32.totalorder %s17, 0
      %p94 = por %p92, %p93
      %p95 = scmp.ne.s32.totalorder %s83, %s84
      %p96 = scmp.eq.s32.totalorder %s18, 1
      %p97 = por %p95, %p96
      %p99 = scmp.ne.s32.totalorder %s84, %s98
      %p100 = scmp.eq.s32.totalorder %s18, 0
      %p101 = por %p99, %p100
      %s102 = ssub.s32 %s19, %s31
      %s103 = ssub.s32 %s20, %s27
      %s104 = sor.u32 %s102, %s103
      %p105 = scmp.eq.s32.totalorder %s104, 0
      %s107 = sadd.s32 %s106, 1
      %s108 = scalar_select %p105, %s106, %s107
      %p111 = pneg %p105
      %p112 = scmp.eq.s32.totalorder %s12, 1
      %p113 = por %p111, %p112
      %p114 = scmp.ne.s32.totalorder %s106, %s109
      %p115 = scmp.eq.s32.totalorder %s12, 0
      %p116 = por %p114, %p115
      %p117 = scmp.ne.s32.totalorder %s106, %s109
      %p118 = scmp.eq.s32.totalorder %s17, 1
      %p119 = por %p117, %p118
      %p120 = scmp.ne.s32.totalorder %s109, %s110
      %p121 = scmp.eq.s32.totalorder %s17, 0
      %p122 = por %p120, %p121
      %p123 = scmp.ne.s32.totalorder %s109, %s110
      %p124 = scmp.eq.s32.totalorder %s18, 1
      %p125 = por %p123, %p124
      %p127 = scmp.ne.s32.totalorder %s110, %s126
      %p128 = scmp.eq.s32.totalorder %s18, 0
      %p129 = por %p127, %p128
      %p130 = scmp.le.s32.totalorder 1, %s12
      %p131 = scmp.lt.s32.totalorder %s12, 3
      %p132 = pnand %p130, %p131
      %p133 = pneg %p132
      // Predicated region
      $region9: #{tpu_custom_call.1} parent=5 // pred_check
        _
      $region10: #{tpu_custom_call.1} parent=5 // pred_check_branch
        %135 = sbr.rel (%p132) target = $region12
      $region11: #{tpu_custom_call.1} parent=5 // pred_region
        %s136 = ssub.s32 %s12, 1
        // Predicated region
        $region13: #{tpu_custom_call.1} parent=11 // pred_check
          %p137 = pneg %p73
        $region14: #{tpu_custom_call.1} parent=11 // pred_check_branch
          %139 = sbr.rel (%p137) target = $region16
        $region15: #{tpu_custom_call.1} parent=11 // pred_region
          _
        $region16: #{tpu_custom_call.1} parent=11 // pred_fallthru
          _
        // Predicated region
        $region17: #{tpu_custom_call.1} parent=11 // pred_check
          %p140 = pneg %p94
        $region18: #{tpu_custom_call.1} parent=11 // pred_check_branch
          %142 = sbr.rel (%p140) target = $region20
        $region19: #{tpu_custom_call.1} parent=11 // pred_region
          _
        $region20: #{tpu_custom_call.1} parent=11 // pred_fallthru
          _
      $region12: #{tpu_custom_call.1} parent=5 // pred_fallthru
        _
      %p143 = scmp.lt.s32.totalorder %s12, 2
      // Predicated region
      $region21: #{tpu_custom_call.1} parent=5 // pred_check
        %p144 = pneg %p143
      $region22: #{tpu_custom_call.1} parent=5 // pred_check_branch
        %146 = sbr.rel (%p144) target = $region24
      $region23: #{tpu_custom_call.1} parent=5 // pred_region
        // Predicated region
        $region25: #{tpu_custom_call.1} parent=23 // pred_check
          %p147 = pneg %p46
        $region26: #{tpu_custom_call.1} parent=23 // pred_check_branch
          %149 = sbr.rel (%p147) target = $region28
        $region27: #{tpu_custom_call.1} parent=23 // pred_region
          %p150 = scmp.lt.s32.totalorder %s19, 1
          %s151 = scalar_select %p150, %s19, 1
          %p152 = scmp.lt.s32.totalorder %s20, 0
          %s153 = scalar_select %p152, %s20, 0
          %s154 = smul.addr %s153, 54
          %s155 = smul.addr %s151, 54
          %s156 = sadd.s32 %s154, %s155
          %s157 = smul.addr %s156, 8
          %s158 = scalar_lea.vmem %s0, %s157
        $region28: #{tpu_custom_call.1} parent=23 // pred_fallthru
          _
      $region24: #{tpu_custom_call.1} parent=5 // pred_fallthru
        _
      %p159 = scmp.le.s32.totalorder 1, %s12
      %p160 = scmp.lt.s32.totalorder %s12, 3
      %p161 = pnand %p159, %p160
      %p162 = pneg %p161
      // Predicated region
      $region29: #{tpu_custom_call.1} parent=5 // pred_check
        _
      $region30: #{tpu_custom_call.1} parent=5 // pred_check_branch
        %164 = sbr.rel (%p161) target = $region32
      $region31: #{tpu_custom_call.1} parent=5 // pred_region
        %s165 = ssub.s32 %s12, 1
        %p166 = scmp.lt.s32.totalorder %s21, 1
        %s167 = scalar_select %p166, %s21, 1
        %p168 = scmp.lt.s32.totalorder %s22, 0
        %s169 = scalar_select %p168, %s22, 0
        %s170 = smul.addr %s169, 54
        %s171 = smul.addr %s167, 54
        %s172 = sadd.s32 %s170, %s171
        %s173 = smul.addr %s172, 8
        %s174 = scalar_lea.vmem %s0, %s173
        %p175 = pneg %p52
        %p176 = pneg %p49
        %p177 = pneg %p73
        %p178 = pneg %p70
        %p179 = pneg %p94
        %p180 = pneg %p91
        %p181 = pneg %p122
        %p182 = pneg %p119
        %s183 = sand.u32 %s109, 1
        %s184 = scalar_lea.sflag [#allocation3], %s183
        %s185 = sand.u32 %s109, 1
        %s186 = smul.addr %s185, 256
        %s187 = scalar_lea.vmem [#allocation2], %s186
        %p188 = scmp.lt.s32.totalorder %s21, 1
        %s189 = scalar_select %p188, %s21, 1
        %p190 = scmp.lt.s32.totalorder %s22, 0
        %s191 = scalar_select %p190, %s22, 0
        %s192 = smul.addr %s191, 54
        %s193 = smul.addr %s189, 54
        %s194 = sadd.s32 %s192, %s193
        %s195 = smul.addr %s194, 8
        %s196 = scalar_lea.vmem %s0, %s195
        %s197 = smul.u32 16, %s22
        %v198 = vld [vmem:[%s196] sm:$0xff]
        %v199 = vld [vmem:[%s196 + $0x8] sm:$0xff]
        %v200 = vld [vmem:[%s196 + $0x10] sm:$0x3]
        %v201 = vld [vmem:[%s196 + $0x18] sm:$0xff]
        %v202 = vld [vmem:[%s196 + $0x20] sm:$0xff]
        %v203 = vld [vmem:[%s196 + $0x28] sm:$0x3]
        %v204 = vld [vmem:[%s196 + $0x30] sm:$0xff]
        %v205 = vld [vmem:[%s196 + $0x38] sm:$0xff]
        %v206 = vld [vmem:[%s196 + $0x40] sm:$0x3]
        %v207 = vld [vmem:[%s196 + $0x48] sm:$0xff]
        %v208 = vld [vmem:[%s196 + $0x50] sm:$0xff]
        %v209 = vld [vmem:[%s196 + $0x58] sm:$0x3]
        %v210 = vld [vmem:[%s196 + $0x60] sm:$0xff]
        %v211 = vld [vmem:[%s196 + $0x68] sm:$0xff]
        %v212 = vld [vmem:[%s196 + $0x70] sm:$0x3]
        %v213 = vld [vmem:[%s196 + $0x78] sm:$0xff]
        %v214 = vld [vmem:[%s196 + $0x80] sm:$0xff]
        %v215 = vld [vmem:[%s196 + $0x88] sm:$0x3]
        %v216 = vld [vmem:[%s196 + $0x90] sm:$0xff]
        %v217 = vld [vmem:[%s196 + $0x98] sm:$0xff]
        %v218 = vld [vmem:[%s196 + $0xa0] sm:$0x3]
        %v219 = vld [vmem:[%s196 + $0xa8] sm:$0xff]
        %v220 = vld [vmem:[%s196 + $0xb0] sm:$0xff]
        %v221 = vld [vmem:[%s196 + $0xb8] sm:$0x3]
        %v222 = vld [vmem:[%s196 + $0xc0] sm:$0xff]
        %v223 = vld [vmem:[%s196 + $0xc8] sm:$0xff]
        %v224 = vld [vmem:[%s196 + $0xd0] sm:$0x3]
        %v225 = vld [vmem:[%s196 + $0xd8] sm:$0xff]
        %v226 = vld [vmem:[%s196 + $0xe0] sm:$0xff]
        %v227 = vld [vmem:[%s196 + $0xe8] sm:$0x3]
        %v228 = vld [vmem:[%s196 + $0xf0] sm:$0xff]
        %v229 = vld [vmem:[%s196 + $0xf8] sm:$0xff]
        %v230 = vld [vmem:[%s196 + $0x100] sm:$0x3]
        %v231 = vld [vmem:[%s196 + $0x108] sm:$0xff]
        %v232 = vld [vmem:[%s196 + $0x110] sm:$0xff]
        %v233 = vld [vmem:[%s196 + $0x118] sm:$0x3]
        %v234 = vld [vmem:[%s196 + $0x120] sm:$0xff]
        %v235 = vld [vmem:[%s196 + $0x128] sm:$0xff]
        %v236 = vld [vmem:[%s196 + $0x130] sm:$0x3]
        %v237 = vld [vmem:[%s196 + $0x138] sm:$0xff]
        %v238 = vld [vmem:[%s196 + $0x140] sm:$0xff]
        %v239 = vld [vmem:[%s196 + $0x148] sm:$0x3]
        %v240 = vld [vmem:[%s196 + $0x150] sm:$0xff]
        %v241 = vld [vmem:[%s196 + $0x158] sm:$0xff]
        %v242 = vld [vmem:[%s196 + $0x160] sm:$0x3]
        %v243 = vld [vmem:[%s196 + $0x168] sm:$0xff]
        %v244 = vld [vmem:[%s196 + $0x170] sm:$0xff]
        %v245 = vld [vmem:[%s196 + $0x178] sm:$0x3]
        %v246 = vld [vmem:[%s196 + $0x180] sm:$0xff]
        %v247 = vld [vmem:[%s196 + $0x188] sm:$0xff]
        %v248 = vld [vmem:[%s196 + $0x190] sm:$0x3]
        %v249 = vld [vmem:[%s196 + $0x198] sm:$0xff]
        %v250 = vld [vmem:[%s196 + $0x1a0] sm:$0xff]
        %v251 = vld [vmem:[%s196 + $0x1a8] sm:$0x3]
        %vm300 = vcmask 1046528
        %v301 = vrot.slane %v198, 1
        %v302 = vrot.slane %v199, 1
        %v303 = vsel %vm300, %v301, %v302
        %v304 = vrot.slane %v200, 1
        %v305 = vsel %vm300, %v302, %v304
        %v306 = vrot.slane %v201, 1
        %v307 = vrot.slane %v202, 1
        %v308 = vsel %vm300, %v306, %v307
        %v309 = vrot.slane %v203, 1
        %v310 = vsel %vm300, %v307, %v309
        %v311 = vrot.slane %v204, 1
        %v312 = vrot.slane %v205, 1
        %v313 = vsel %vm300, %v311, %v312
        %v314 = vrot.slane %v206, 1
        %v315 = vsel %vm300, %v312, %v314
        %v316 = vrot.slane %v207, 1
        %v317 = vrot.slane %v208, 1
        %v318 = vsel %vm300, %v316, %v317
        %v319 = vrot.slane %v209, 1
        %v320 = vsel %vm300, %v317, %v319
        %v321 = vrot.slane %v210, 1
        %v322 = vrot.slane %v211, 1
        %v323 = vsel %vm300, %v321, %v322
        %v324 = vrot.slane %v212, 1
        %v325 = vsel %vm300, %v322, %v324
        %v326 = vrot.slane %v213, 1
        %v327 = vrot.slane %v214, 1
        %v328 = vsel %vm300, %v326, %v327
        %v329 = vrot.slane %v215, 1
        %v330 = vsel %vm300, %v327, %v329
        %v331 = vrot.slane %v216, 1
        %v332 = vrot.slane %v217, 1
        %v333 = vsel %vm300, %v331, %v332
        %v334 = vrot.slane %v218, 1
        %v335 = vsel %vm300, %v332, %v334
        %v336 = vrot.slane %v219, 1
        %v337 = vrot.slane %v220, 1
        %v338 = vsel %vm300, %v336, %v337
        %v339 = vrot.slane %v221, 1
        %v340 = vsel %vm300, %v337, %v339
        %v341 = vrot.slane %v222, 1
        %v342 = vrot.slane %v223, 1
        %v343 = vsel %vm300, %v341, %v342
        %v344 = vrot.slane %v224, 1
        %v345 = vsel %vm300, %v342, %v344
        %v346 = vrot.slane %v225, 1
        %v347 = vrot.slane %v226, 1
        %v348 = vsel %vm300, %v346, %v347
        %v349 = vrot.slane %v227, 1
        %v350 = vsel %vm300, %v347, %v349
        %v351 = vrot.slane %v228, 1
        %v352 = vrot.slane %v229, 1
        %v353 = vsel %vm300, %v351, %v352
        %v354 = vrot.slane %v230, 1
        %v355 = vsel %vm300, %v352, %v354
        %v356 = vrot.slane %v231, 1
        %v357 = vrot.slane %v232, 1
        %v358 = vsel %vm300, %v356, %v357
        %v359 = vrot.slane %v233, 1
        %v360 = vsel %vm300, %v357, %v359
        %v361 = vrot.slane %v234, 1
        %v362 = vrot.slane %v235, 1
        %v363 = vsel %vm300, %v361, %v362
        %v364 = vrot.slane %v236, 1
        %v365 = vsel %vm300, %v362, %v364
        %v366 = vrot.slane %v237, 1
        %v367 = vrot.slane %v238, 1
        %v368 = vsel %vm300, %v366, %v367
        %v369 = vrot.slane %v239, 1
        %v370 = vsel %vm300, %v367, %v369
        %v371 = vrot.slane %v240, 1
        %v372 = vrot.slane %v241, 1
        %v373 = vsel %vm300, %v371, %v372
        %v374 = vrot.slane %v242, 1
        %v375 = vsel %vm300, %v372, %v374
        %v376 = vrot.slane %v243, 1
        %v377 = vrot.slane %v244, 1
        %v378 = vsel %vm300, %v376, %v377
        %v379 = vrot.slane %v245, 1
        %v380 = vsel %vm300, %v377, %v379
        %381 = vrot.lane.b32.xlu0 %v303, 4
        %v382 = vpop.permute.xlu0 %381
        %383 = vrot.lane.b32.xlu0 %v305, 4
        %v384 = vpop.permute.xlu0 %383
        %385 = vrot.lane.b32.xlu0 %v308, 4
        %v386 = vpop.permute.xlu0 %385
        %387 = vrot.lane.b32.xlu0 %v310, 4
        %v388 = vpop.permute.xlu0 %387
        %389 = vrot.lane.b32.xlu0 %v313, 4
        %v390 = vpop.permute.xlu0 %389
        %391 = vrot.lane.b32.xlu0 %v315, 4
        %v392 = vpop.permute.xlu0 %391
        %393 = vrot.lane.b32.xlu0 %v318, 4
        %v394 = vpop.permute.xlu0 %393
        %395 = vrot.lane.b32.xlu0 %v320, 4
        %v396 = vpop.permute.xlu0 %395
        %397 = vrot.lane.b32.xlu0 %v323, 4
        %v398 = vpop.permute.xlu0 %397
        %399 = vrot.lane.b32.xlu0 %v325, 4
        %v400 = vpop.permute.xlu0 %399
        %401 = vrot.lane.b32.xlu0 %v328, 4
        %v402 = vpop.permute.xlu0 %401
        %403 = vrot.lane.b32.xlu0 %v330, 4
        %v404 = vpop.permute.xlu0 %403
        %405 = vrot.lane.b32.xlu0 %v333, 4
        %v406 = vpop.permute.xlu0 %405
        %407 = vrot.lane.b32.xlu0 %v335, 4
        %v408 = vpop.permute.xlu0 %407
        %409 = vrot.lane.b32.xlu0 %v338, 4
        %v410 = vpop.permute.xlu0 %409
        %411 = vrot.lane.b32.xlu0 %v340, 4
        %v412 = vpop.permute.xlu0 %411
        %413 = vrot.lane.b32.xlu0 %v343, 4
        %v414 = vpop.permute.xlu0 %413
        %415 = vrot.lane.b32.xlu0 %v345, 4
        %v416 = vpop.permute.xlu0 %415
        %417 = vrot.lane.b32.xlu0 %v348, 4
        %v418 = vpop.permute.xlu0 %417
        %419 = vrot.lane.b32.xlu0 %v350, 4
        %v420 = vpop.permute.xlu0 %419
        %421 = vrot.lane.b32.xlu0 %v353, 4
        %v422 = vpop.permute.xlu0 %421
        %423 = vrot.lane.b32.xlu0 %v355, 4
        %v424 = vpop.permute.xlu0 %423
        %425 = vrot.lane.b32.xlu0 %v358, 4
        %v426 = vpop.permute.xlu0 %425
        %427 = vrot.lane.b32.xlu0 %v360, 4
        %v428 = vpop.permute.xlu0 %427
        %429 = vrot.lane.b32.xlu0 %v363, 4
        %v430 = vpop.permute.xlu0 %429
        %431 = vrot.lane.b32.xlu0 %v365, 4
        %v432 = vpop.permute.xlu0 %431
        %433 = vrot.lane.b32.xlu0 %v368, 4
        %v434 = vpop.permute.xlu0 %433
        %435 = vrot.lane.b32.xlu0 %v370, 4
        %v436 = vpop.permute.xlu0 %435
        %437 = vrot.lane.b32.xlu0 %v373, 4
        %v438 = vpop.permute.xlu0 %437
        %439 = vrot.lane.b32.xlu0 %v375, 4
        %v440 = vpop.permute.xlu0 %439
        %441 = vrot.lane.b32.xlu0 %v378, 4
        %v442 = vpop.permute.xlu0 %441
        %443 = vrot.lane.b32.xlu0 %v380, 4
        %v444 = vpop.permute.xlu0 %443
        %vm477 = vcmask 1045504
        %v478 = vrot.slane %v198, 2
        %v479 = vrot.slane %v199, 2
        %v480 = vsel %vm477, %v478, %v479
        %v481 = vrot.slane %v200, 2
        %v482 = vsel %vm477, %v479, %v481
        %v483 = vrot.slane %v201, 2
        %v484 = vrot.slane %v202, 2
        %v485 = vsel %vm477, %v483, %v484
        %v486 = vrot.slane %v203, 2
        %v487 = vsel %vm477, %v484, %v486
        %v488 = vrot.slane %v204, 2
        %v489 = vrot.slane %v205, 2
        %v490 = vsel %vm477, %v488, %v489
        %v491 = vrot.slane %v206, 2
        %v492 = vsel %vm477, %v489, %v491
        %v493 = vrot.slane %v207, 2
        %v494 = vrot.slane %v208, 2
        %v495 = vsel %vm477, %v493, %v494
        %v496 = vrot.slane %v209, 2
        %v497 = vsel %vm477, %v494, %v496
        %v498 = vrot.slane %v210, 2
        %v499 = vrot.slane %v211, 2
        %v500 = vsel %vm477, %v498, %v499
        %v501 = vrot.slane %v212, 2
        %v502 = vsel %vm477, %v499, %v501
        %v503 = vrot.slane %v213, 2
        %v504 = vrot.slane %v214, 2
        %v505 = vsel %vm477, %v503, %v504
        %v506 = vrot.slane %v215, 2
        %v507 = vsel %vm477, %v504, %v506
        %v508 = vrot.slane %v216, 2
        %v509 = vrot.slane %v217, 2
        %v510 = vsel %vm477, %v508, %v509
        %v511 = vrot.slane %v218, 2
        %v512 = vsel %vm477, %v509, %v511
        %v513 = vrot.slane %v219, 2
        %v514 = vrot.slane %v220, 2
        %v515 = vsel %vm477, %v513, %v514
        %v516 = vrot.slane %v221, 2
        %v517 = vsel %vm477, %v514, %v516
        %v518 = vrot.slane %v222, 2
        %v519 = vrot.slane %v223, 2
        %v520 = vsel %vm477, %v518, %v519
        %v521 = vrot.slane %v224, 2
        %v522 = vsel %vm477, %v519, %v521
        %v523 = vrot.slane %v225, 2
        %v524 = vrot.slane %v226, 2
        %v525 = vsel %vm477, %v523, %v524
        %v526 = vrot.slane %v227, 2
        %v527 = vsel %vm477, %v524, %v526
        %v528 = vrot.slane %v228, 2
        %v529 = vrot.slane %v229, 2
        %v530 = vsel %vm477, %v528, %v529
        %v531 = vrot.slane %v230, 2
        %v532 = vsel %vm477, %v529, %v531
        %v533 = vrot.slane %v231, 2
        %v534 = vrot.slane %v232, 2
        %v535 = vsel %vm477, %v533, %v534
        %v536 = vrot.slane %v233, 2
        %v537 = vsel %vm477, %v534, %v536
        %v538 = vrot.slane %v234, 2
        %v539 = vrot.slane %v235, 2
        %v540 = vsel %vm477, %v538, %v539
        %v541 = vrot.slane %v236, 2
        %v542 = vsel %vm477, %v539, %v541
        %v543 = vrot.slane %v237, 2
        %v544 = vrot.slane %v238, 2
        %v545 = vsel %vm477, %v543, %v544
        %v546 = vrot.slane %v239, 2
        %v547 = vsel %vm477, %v544, %v546
        %v548 = vrot.slane %v240, 2
        %v549 = vrot.slane %v241, 2
        %v550 = vsel %vm477, %v548, %v549
        %v551 = vrot.slane %v242, 2
        %v552 = vsel %vm477, %v549, %v551
        %v553 = vrot.slane %v243, 2
        %v554 = vrot.slane %v244, 2
        %v555 = vsel %vm477, %v553, %v554
        %v556 = vrot.slane %v245, 2
        %v557 = vsel %vm477, %v554, %v556
        %558 = vrot.lane.b32.xlu0 %v480, 8
        %v559 = vpop.permute.xlu0 %558
        %560 = vrot.lane.b32.xlu0 %v482, 8
        %v561 = vpop.permute.xlu0 %560
        %562 = vrot.lane.b32.xlu0 %v485, 8
        %v563 = vpop.permute.xlu0 %562
        %564 = vrot.lane.b32.xlu0 %v487, 8
        %v565 = vpop.permute.xlu0 %564
        %566 = vrot.lane.b32.xlu0 %v490, 8
        %v567 = vpop.permute.xlu0 %566
        %568 = vrot.lane.b32.xlu0 %v492, 8
        %v569 = vpop.permute.xlu0 %568
        %570 = vrot.lane.b32.xlu0 %v495, 8
        %v571 = vpop.permute.xlu0 %570
        %572 = vrot.lane.b32.xlu0 %v497, 8
        %v573 = vpop.permute.xlu0 %572
        %574 = vrot.lane.b32.xlu0 %v500, 8
        %v575 = vpop.permute.xlu0 %574
        %576 = vrot.lane.b32.xlu0 %v502, 8
        %v577 = vpop.permute.xlu0 %576
        %578 = vrot.lane.b32.xlu0 %v505, 8
        %v579 = vpop.permute.xlu0 %578
        %580 = vrot.lane.b32.xlu0 %v507, 8
        %v581 = vpop.permute.xlu0 %580
        %582 = vrot.lane.b32.xlu0 %v510, 8
        %v583 = vpop.permute.xlu0 %582
        %584 = vrot.lane.b32.xlu0 %v512, 8
        %v585 = vpop.permute.xlu0 %584
        %586 = vrot.lane.b32.xlu0 %v515, 8
        %v587 = vpop.permute.xlu0 %586
        %588 = vrot.lane.b32.xlu0 %v517, 8
        %v589 = vpop.permute.xlu0 %588
        %590 = vrot.lane.b32.xlu0 %v520, 8
        %v591 = vpop.permute.xlu0 %590
        %592 = vrot.lane.b32.xlu0 %v522, 8
        %v593 = vpop.permute.xlu0 %592
        %594 = vrot.lane.b32.xlu0 %v525, 8
        %v595 = vpop.permute.xlu0 %594
        %596 = vrot.lane.b32.xlu0 %v527, 8
        %v597 = vpop.permute.xlu0 %596
        %598 = vrot.lane.b32.xlu0 %v530, 8
        %v599 = vpop.permute.xlu0 %598
        %600 = vrot.lane.b32.xlu0 %v532, 8
        %v601 = vpop.permute.xlu0 %600
        %602 = vrot.lane.b32.xlu0 %v535, 8
        %v603 = vpop.permute.xlu0 %602
        %604 = vrot.lane.b32.xlu0 %v537, 8
        %v605 = vpop.permute.xlu0 %604
        %606 = vrot.lane.b32.xlu0 %v540, 8
        %v607 = vpop.permute.xlu0 %606
        %608 = vrot.lane.b32.xlu0 %v542, 8
        %v609 = vpop.permute.xlu0 %608
        %610 = vrot.lane.b32.xlu0 %v545, 8
        %v611 = vpop.permute.xlu0 %610
        %612 = vrot.lane.b32.xlu0 %v547, 8
        %v613 = vpop.permute.xlu0 %612
        %614 = vrot.lane.b32.xlu0 %v550, 8
        %v615 = vpop.permute.xlu0 %614
        %616 = vrot.lane.b32.xlu0 %v552, 8
        %v617 = vpop.permute.xlu0 %616
        %618 = vrot.lane.b32.xlu0 %v555, 8
        %v619 = vpop.permute.xlu0 %618
        %620 = vrot.lane.b32.xlu0 %v557, 8
        %v621 = vpop.permute.xlu0 %620
        %656 = vrot.lane.b32.xlu0 %v201, 12
        %v657 = vpop.permute.xlu0 %656
        %658 = vrot.lane.b32.xlu0 %v202, 12
        %v659 = vpop.permute.xlu0 %658
        %660 = vrot.lane.b32.xlu0 %v204, 12
        %v661 = vpop.permute.xlu0 %660
        %662 = vrot.lane.b32.xlu0 %v205, 12
        %v663 = vpop.permute.xlu0 %662
        %664 = vrot.lane.b32.xlu0 %v207, 12
        %v665 = vpop.permute.xlu0 %664
        %666 = vrot.lane.b32.xlu0 %v208, 12
        %v667 = vpop.permute.xlu0 %666
        %668 = vrot.lane.b32.xlu0 %v210, 12
        %v669 = vpop.permute.xlu0 %668
        %670 = vrot.lane.b32.xlu0 %v211, 12
        %v671 = vpop.permute.xlu0 %670
        %672 = vrot.lane.b32.xlu0 %v213, 12
        %v673 = vpop.permute.xlu0 %672
        %674 = vrot.lane.b32.xlu0 %v214, 12
        %v675 = vpop.permute.xlu0 %674
        %676 = vrot.lane.b32.xlu0 %v216, 12
        %v677 = vpop.permute.xlu0 %676
        %678 = vrot.lane.b32.xlu0 %v217, 12
        %v679 = vpop.permute.xlu0 %678
        %680 = vrot.lane.b32.xlu0 %v219, 12
        %v681 = vpop.permute.xlu0 %680
        %682 = vrot.lane.b32.xlu0 %v220, 12
        %v683 = vpop.permute.xlu0 %682
        %684 = vrot.lane.b32.xlu0 %v222, 12
        %v685 = vpop.permute.xlu0 %684
        %686 = vrot.lane.b32.xlu0 %v223, 12
        %v687 = vpop.permute.xlu0 %686
        %688 = vrot.lane.b32.xlu0 %v225, 12
        %v689 = vpop.permute.xlu0 %688
        %690 = vrot.lane.b32.xlu0 %v226, 12
        %v691 = vpop.permute.xlu0 %690
        %692 = vrot.lane.b32.xlu0 %v228, 12
        %v693 = vpop.permute.xlu0 %692
        %694 = vrot.lane.b32.xlu0 %v229, 12
        %v695 = vpop.permute.xlu0 %694
        %696 = vrot.lane.b32.xlu0 %v231, 12
        %v697 = vpop.permute.xlu0 %696
        %698 = vrot.lane.b32.xlu0 %v232, 12
        %v699 = vpop.permute.xlu0 %698
        %700 = vrot.lane.b32.xlu0 %v234, 12
        %v701 = vpop.permute.xlu0 %700
        %702 = vrot.lane.b32.xlu0 %v235, 12
        %v703 = vpop.permute.xlu0 %702
        %704 = vrot.lane.b32.xlu0 %v237, 12
        %v705 = vpop.permute.xlu0 %704
        %706 = vrot.lane.b32.xlu0 %v238, 12
        %v707 = vpop.permute.xlu0 %706
        %708 = vrot.lane.b32.xlu0 %v240, 12
        %v709 = vpop.permute.xlu0 %708
        %710 = vrot.lane.b32.xlu0 %v241, 12
        %v711 = vpop.permute.xlu0 %710
        %712 = vrot.lane.b32.xlu0 %v243, 12
        %v713 = vpop.permute.xlu0 %712
        %714 = vrot.lane.b32.xlu0 %v244, 12
        %v715 = vpop.permute.xlu0 %714
        %716 = vrot.lane.b32.xlu0 %v246, 12
        %v717 = vpop.permute.xlu0 %716
        %718 = vrot.lane.b32.xlu0 %v247, 12
        %v719 = vpop.permute.xlu0 %718
        %v753 = vrot.slane %v246, 1
        %v754 = vrot.slane %v247, 1
        %v755 = vsel %vm300, %v753, %v754
        %v756 = vrot.slane %v248, 1
        %v757 = vsel %vm300, %v754, %v756
        %758 = vrot.lane.b32.xlu0 %v308, 16
        %v759 = vpop.permute.xlu0 %758
        %760 = vrot.lane.b32.xlu0 %v310, 16
        %v761 = vpop.permute.xlu0 %760
        %762 = vrot.lane.b32.xlu0 %v313, 16
        %v763 = vpop.permute.xlu0 %762
        %764 = vrot.lane.b32.xlu0 %v315, 16
        %v765 = vpop.permute.xlu0 %764
        %766 = vrot.lane.b32.xlu0 %v318, 16
        %v767 = vpop.permute.xlu0 %766
        %768 = vrot.lane.b32.xlu0 %v320, 16
        %v769 = vpop.permute.xlu0 %768
        %770 = vrot.lane.b32.xlu0 %v323, 16
        %v771 = vpop.permute.xlu0 %770
        %772 = vrot.lane.b32.xlu0 %v325, 16
        %v773 = vpop.permute.xlu0 %772
        %774 = vrot.lane.b32.xlu0 %v328, 16
        %v775 = vpop.permute.xlu0 %774
        %776 = vrot.lane.b32.xlu0 %v330, 16
        %v777 = vpop.permute.xlu0 %776
        %778 = vrot.lane.b32.xlu0 %v333, 16
        %v779 = vpop.permute.xlu0 %778
        %780 = vrot.lane.b32.xlu0 %v335, 16
        %v781 = vpop.permute.xlu0 %780
        %782 = vrot.lane.b32.xlu0 %v338, 16
        %v783 = vpop.permute.xlu0 %782
        %784 = vrot.lane.b32.xlu0 %v340, 16
        %v785 = vpop.permute.xlu0 %784
        %786 = vrot.lane.b32.xlu0 %v343, 16
        %v787 = vpop.permute.xlu0 %786
        %788 = vrot.lane.b32.xlu0 %v345, 16
        %v789 = vpop.permute.xlu0 %788
        %790 = vrot.lane.b32.xlu0 %v348, 16
        %v791 = vpop.permute.xlu0 %790
        %792 = vrot.lane.b32.xlu0 %v350, 16
        %v793 = vpop.permute.xlu0 %792
        %794 = vrot.lane.b32.xlu0 %v353, 16
        %v795 = vpop.permute.xlu0 %794
        %796 = vrot.lane.b32.xlu0 %v355, 16
        %v797 = vpop.permute.xlu0 %796
        %798 = vrot.lane.b32.xlu0 %v358, 16
        %v799 = vpop.permute.xlu0 %798
        %800 = vrot.lane.b32.xlu0 %v360, 16
        %v801 = vpop.permute.xlu0 %800
        %802 = vrot.lane.b32.xlu0 %v363, 16
        %v803 = vpop.permute.xlu0 %802
        %804 = vrot.lane.b32.xlu0 %v365, 16
        %v805 = vpop.permute.xlu0 %804
        %806 = vrot.lane.b32.xlu0 %v368, 16
        %v807 = vpop.permute.xlu0 %806
        %808 = vrot.lane.b32.xlu0 %v370, 16
        %v809 = vpop.permute.xlu0 %808
        %810 = vrot.lane.b32.xlu0 %v373, 16
        %v811 = vpop.permute.xlu0 %810
        %812 = vrot.lane.b32.xlu0 %v375, 16
        %v813 = vpop.permute.xlu0 %812
        %814 = vrot.lane.b32.xlu0 %v378, 16
        %v815 = vpop.permute.xlu0 %814
        %816 = vrot.lane.b32.xlu0 %v380, 16
        %v817 = vpop.permute.xlu0 %816
        %818 = vrot.lane.b32.xlu0 %v755, 16
        %v819 = vpop.permute.xlu0 %818
        %820 = vrot.lane.b32.xlu0 %v757, 16
        %v821 = vpop.permute.xlu0 %820
        %v854 = vrot.slane %v246, 2
        %v855 = vrot.slane %v247, 2
        %v856 = vsel %vm477, %v854, %v855
        %v857 = vrot.slane %v248, 2
        %v858 = vsel %vm477, %v855, %v857
        %859 = vrot.lane.b32.xlu0 %v485, 20
        %v860 = vpop.permute.xlu0 %859
        %861 = vrot.lane.b32.xlu0 %v487, 20
        %v862 = vpop.permute.xlu0 %861
        %863 = vrot.lane.b32.xlu0 %v490, 20
        %v864 = vpop.permute.xlu0 %863
        %865 = vrot.lane.b32.xlu0 %v492, 20
        %v866 = vpop.permute.xlu0 %865
        %867 = vrot.lane.b32.xlu0 %v495, 20
        %v868 = vpop.permute.xlu0 %867
        %869 = vrot.lane.b32.xlu0 %v497, 20
        %v870 = vpop.permute.xlu0 %869
        %871 = vrot.lane.b32.xlu0 %v500, 20
        %v872 = vpop.permute.xlu0 %871
        %873 = vrot.lane.b32.xlu0 %v502, 20
        %v874 = vpop.permute.xlu0 %873
        %875 = vrot.lane.b32.xlu0 %v505, 20
        %v876 = vpop.permute.xlu0 %875
        %877 = vrot.lane.b32.xlu0 %v507, 20
        %v878 = vpop.permute.xlu0 %877
        %879 = vrot.lane.b32.xlu0 %v510, 20
        %v880 = vpop.permute.xlu0 %879
        %881 = vrot.lane.b32.xlu0 %v512, 20
        %v882 = vpop.permute.xlu0 %881
        %883 = vrot.lane.b32.xlu0 %v515, 20
        %v884 = vpop.permute.xlu0 %883
        %885 = vrot.lane.b32.xlu0 %v517, 20
        %v886 = vpop.permute.xlu0 %885
        %887 = vrot.lane.b32.xlu0 %v520, 20
        %v888 = vpop.permute.xlu0 %887
        %889 = vrot.lane.b32.xlu0 %v522, 20
        %v890 = vpop.permute.xlu0 %889
        %891 = vrot.lane.b32.xlu0 %v525, 20
        %v892 = vpop.permute.xlu0 %891
        %893 = vrot.lane.b32.xlu0 %v527, 20
        %v894 = vpop.permute.xlu0 %893
        %895 = vrot.lane.b32.xlu0 %v530, 20
        %v896 = vpop.permute.xlu0 %895
        %897 = vrot.lane.b32.xlu0 %v532, 20
        %v898 = vpop.permute.xlu0 %897
        %899 = vrot.lane.b32.xlu0 %v535, 20
        %v900 = vpop.permute.xlu0 %899
        %901 = vrot.lane.b32.xlu0 %v537, 20
        %v902 = vpop.permute.xlu0 %901
        %903 = vrot.lane.b32.xlu0 %v540, 20
        %v904 = vpop.permute.xlu0 %903
        %905 = vrot.lane.b32.xlu0 %v542, 20
        %v906 = vpop.permute.xlu0 %905
        %907 = vrot.lane.b32.xlu0 %v545, 20
        %v908 = vpop.permute.xlu0 %907
        %909 = vrot.lane.b32.xlu0 %v547, 20
        %v910 = vpop.permute.xlu0 %909
        %911 = vrot.lane.b32.xlu0 %v550, 20
        %v912 = vpop.permute.xlu0 %911
        %913 = vrot.lane.b32.xlu0 %v552, 20
        %v914 = vpop.permute.xlu0 %913
        %915 = vrot.lane.b32.xlu0 %v555, 20
        %v916 = vpop.permute.xlu0 %915
        %917 = vrot.lane.b32.xlu0 %v557, 20
        %v918 = vpop.permute.xlu0 %917
        %919 = vrot.lane.b32.xlu0 %v856, 20
        %v920 = vpop.permute.xlu0 %919
        %921 = vrot.lane.b32.xlu0 %v858, 20
        %v922 = vpop.permute.xlu0 %921
        %957 = vrot.lane.b32.xlu0 %v204, 24
        %v958 = vpop.permute.xlu0 %957
        %959 = vrot.lane.b32.xlu0 %v205, 24
        %v960 = vpop.permute.xlu0 %959
        %961 = vrot.lane.b32.xlu0 %v207, 24
        %v962 = vpop.permute.xlu0 %961
        %963 = vrot.lane.b32.xlu0 %v208, 24
        %v964 = vpop.permute.xlu0 %963
        %965 = vrot.lane.b32.xlu0 %v210, 24
        %v966 = vpop.permute.xlu0 %965
        %967 = vrot.lane.b32.xlu0 %v211, 24
        %v968 = vpop.permute.xlu0 %967
        %969 = vrot.lane.b32.xlu0 %v213, 24
        %v970 = vpop.permute.xlu0 %969
        %971 = vrot.lane.b32.xlu0 %v214, 24
        %v972 = vpop.permute.xlu0 %971
        %973 = vrot.lane.b32.xlu0 %v216, 24
        %v974 = vpop.permute.xlu0 %973
        %975 = vrot.lane.b32.xlu0 %v217, 24
        %v976 = vpop.permute.xlu0 %975
        %977 = vrot.lane.b32.xlu0 %v219, 24
        %v978 = vpop.permute.xlu0 %977
        %979 = vrot.lane.b32.xlu0 %v220, 24
        %v980 = vpop.permute.xlu0 %979
        %981 = vrot.lane.b32.xlu0 %v222, 24
        %v982 = vpop.permute.xlu0 %981
        %983 = vrot.lane.b32.xlu0 %v223, 24
        %v984 = vpop.permute.xlu0 %983
        %985 = vrot.lane.b32.xlu0 %v225, 24
        %v986 = vpop.permute.xlu0 %985
        %987 = vrot.lane.b32.xlu0 %v226, 24
        %v988 = vpop.permute.xlu0 %987
        %989 = vrot.lane.b32.xlu0 %v228, 24
        %v990 = vpop.permute.xlu0 %989
        %991 = vrot.lane.b32.xlu0 %v229, 24
        %v992 = vpop.permute.xlu0 %991
        %993 = vrot.lane.b32.xlu0 %v231, 24
        %v994 = vpop.permute.xlu0 %993
        %995 = vrot.lane.b32.xlu0 %v232, 24
        %v996 = vpop.permute.xlu0 %995
        %997 = vrot.lane.b32.xlu0 %v234, 24
        %v998 = vpop.permute.xlu0 %997
        %999 = vrot.lane.b32.xlu0 %v235, 24
        %v1000 = vpop.permute.xlu0 %999
        %1001 = vrot.lane.b32.xlu0 %v237, 24
        %v1002 = vpop.permute.xlu0 %1001
        %1003 = vrot.lane.b32.xlu0 %v238, 24
        %v1004 = vpop.permute.xlu0 %1003
        %1005 = vrot.lane.b32.xlu0 %v240, 24
        %v1006 = vpop.permute.xlu0 %1005
        %1007 = vrot.lane.b32.xlu0 %v241, 24
        %v1008 = vpop.permute.xlu0 %1007
        %1009 = vrot.lane.b32.xlu0 %v243, 24
        %v1010 = vpop.permute.xlu0 %1009
        %1011 = vrot.lane.b32.xlu0 %v244, 24
        %v1012 = vpop.permute.xlu0 %1011
        %1013 = vrot.lane.b32.xlu0 %v246, 24
        %v1014 = vpop.permute.xlu0 %1013
        %1015 = vrot.lane.b32.xlu0 %v247, 24
        %v1016 = vpop.permute.xlu0 %1015
        %1017 = vrot.lane.b32.xlu0 %v249, 24
        %v1018 = vpop.permute.xlu0 %1017
        %1019 = vrot.lane.b32.xlu0 %v250, 24
        %v1020 = vpop.permute.xlu0 %1019
        %v1054 = vrot.slane %v249, 1
        %v1055 = vrot.slane %v250, 1
        %v1056 = vsel %vm300, %v1054, %v1055
        %v1057 = vrot.slane %v251, 1
        %v1058 = vsel %vm300, %v1055, %v1057
        %1059 = vrot.lane.b32.xlu0 %v313, 28
        %v1060 = vpop.permute.xlu0 %1059
        %1061 = vrot.lane.b32.xlu0 %v315, 28
        %v1062 = vpop.permute.xlu0 %1061
        %1063 = vrot.lane.b32.xlu0 %v318, 28
        %v1064 = vpop.permute.xlu0 %1063
        %1065 = vrot.lane.b32.xlu0 %v320, 28
        %v1066 = vpop.permute.xlu0 %1065
        %1067 = vrot.lane.b32.xlu0 %v323, 28
        %v1068 = vpop.permute.xlu0 %1067
        %1069 = vrot.lane.b32.xlu0 %v325, 28
        %v1070 = vpop.permute.xlu0 %1069
        %1071 = vrot.lane.b32.xlu0 %v328, 28
        %v1072 = vpop.permute.xlu0 %1071
        %1073 = vrot.lane.b32.xlu0 %v330, 28
        %v1074 = vpop.permute.xlu0 %1073
        %1075 = vrot.lane.b32.xlu0 %v333, 28
        %v1076 = vpop.permute.xlu0 %1075
        %1077 = vrot.lane.b32.xlu0 %v335, 28
        %v1078 = vpop.permute.xlu0 %1077
        %1079 = vrot.lane.b32.xlu0 %v338, 28
        %v1080 = vpop.permute.xlu0 %1079
        %1081 = vrot.lane.b32.xlu0 %v340, 28
        %v1082 = vpop.permute.xlu0 %1081
        %1083 = vrot.lane.b32.xlu0 %v343, 28
        %v1084 = vpop.permute.xlu0 %1083
        %1085 = vrot.lane.b32.xlu0 %v345, 28
        %v1086 = vpop.permute.xlu0 %1085
        %1087 = vrot.lane.b32.xlu0 %v348, 28
        %v1088 = vpop.permute.xlu0 %1087
        %1089 = vrot.lane.b32.xlu0 %v350, 28
        %v1090 = vpop.permute.xlu0 %1089
        %1091 = vrot.lane.b32.xlu0 %v353, 28
        %v1092 = vpop.permute.xlu0 %1091
        %1093 = vrot.lane.b32.xlu0 %v355, 28
        %v1094 = vpop.permute.xlu0 %1093
        %1095 = vrot.lane.b32.xlu0 %v358, 28
        %v1096 = vpop.permute.xlu0 %1095
        %1097 = vrot.lane.b32.xlu0 %v360, 28
        %v1098 = vpop.permute.xlu0 %1097
        %1099 = vrot.lane.b32.xlu0 %v363, 28
        %v1100 = vpop.permute.xlu0 %1099
        %1101 = vrot.lane.b32.xlu0 %v365, 28
        %v1102 = vpop.permute.xlu0 %1101
        %1103 = vrot.lane.b32.xlu0 %v368, 28
        %v1104 = vpop.permute.xlu0 %1103
        %1105 = vrot.lane.b32.xlu0 %v370, 28
        %v1106 = vpop.permute.xlu0 %1105
        %1107 = vrot.lane.b32.xlu0 %v373, 28
        %v1108 = vpop.permute.xlu0 %1107
        %1109 = vrot.lane.b32.xlu0 %v375, 28
        %v1110 = vpop.permute.xlu0 %1109
        %1111 = vrot.lane.b32.xlu0 %v378, 28
        %v1112 = vpop.permute.xlu0 %1111
        %1113 = vrot.lane.b32.xlu0 %v380, 28
        %v1114 = vpop.permute.xlu0 %1113
        %1115 = vrot.lane.b32.xlu0 %v755, 28
        %v1116 = vpop.permute.xlu0 %1115
        %1117 = vrot.lane.b32.xlu0 %v757, 28
        %v1118 = vpop.permute.xlu0 %1117
        %1119 = vrot.lane.b32.xlu0 %v1056, 28
        %v1120 = vpop.permute.xlu0 %1119
        %1121 = vrot.lane.b32.xlu0 %v1058, 28
        %v1122 = vpop.permute.xlu0 %1121
        %v1155 = vrot.slane %v249, 2
        %v1156 = vrot.slane %v250, 2
        %v1157 = vsel %vm477, %v1155, %v1156
        %v1158 = vrot.slane %v251, 2
        %v1159 = vsel %vm477, %v1156, %v1158
        %1160 = vrot.lane.b32.xlu0 %v490, 32
        %v1161 = vpop.permute.xlu0 %1160
        %1162 = vrot.lane.b32.xlu0 %v492, 32
        %v1163 = vpop.permute.xlu0 %1162
        %1164 = vrot.lane.b32.xlu0 %v495, 32
        %v1165 = vpop.permute.xlu0 %1164
        %1166 = vrot.lane.b32.xlu0 %v497, 32
        %v1167 = vpop.permute.xlu0 %1166
        %1168 = vrot.lane.b32.xlu0 %v500, 32
        %v1169 = vpop.permute.xlu0 %1168
        %1170 = vrot.lane.b32.xlu0 %v502, 32
        %v1171 = vpop.permute.xlu0 %1170
        %1172 = vrot.lane.b32.xlu0 %v505, 32
        %v1173 = vpop.permute.xlu0 %1172
        %1174 = vrot.lane.b32.xlu0 %v507, 32
        %v1175 = vpop.permute.xlu0 %1174
        %1176 = vrot.lane.b32.xlu0 %v510, 32
        %v1177 = vpop.permute.xlu0 %1176
        %1178 = vrot.lane.b32.xlu0 %v512, 32
        %v1179 = vpop.permute.xlu0 %1178
        %1180 = vrot.lane.b32.xlu0 %v515, 32
        %v1181 = vpop.permute.xlu0 %1180
        %1182 = vrot.lane.b32.xlu0 %v517, 32
        %v1183 = vpop.permute.xlu0 %1182
        %1184 = vrot.lane.b32.xlu0 %v520, 32
        %v1185 = vpop.permute.xlu0 %1184
        %1186 = vrot.lane.b32.xlu0 %v522, 32
        %v1187 = vpop.permute.xlu0 %1186
        %1188 = vrot.lane.b32.xlu0 %v525, 32
        %v1189 = vpop.permute.xlu0 %1188
        %1190 = vrot.lane.b32.xlu0 %v527, 32
        %v1191 = vpop.permute.xlu0 %1190
        %1192 = vrot.lane.b32.xlu0 %v530, 32
        %v1193 = vpop.permute.xlu0 %1192
        %1194 = vrot.lane.b32.xlu0 %v532, 32
        %v1195 = vpop.permute.xlu0 %1194
        %1196 = vrot.lane.b32.xlu0 %v535, 32
        %v1197 = vpop.permute.xlu0 %1196
        %1198 = vrot.lane.b32.xlu0 %v537, 32
        %v1199 = vpop.permute.xlu0 %1198
        %1200 = vrot.lane.b32.xlu0 %v540, 32
        %v1201 = vpop.permute.xlu0 %1200
        %1202 = vrot.lane.b32.xlu0 %v542, 32
        %v1203 = vpop.permute.xlu0 %1202
        %1204 = vrot.lane.b32.xlu0 %v545, 32
        %v1205 = vpop.permute.xlu0 %1204
        %1206 = vrot.lane.b32.xlu0 %v547, 32
        %v1207 = vpop.permute.xlu0 %1206
        %1208 = vrot.lane.b32.xlu0 %v550, 32
        %v1209 = vpop.permute.xlu0 %1208
        %1210 = vrot.lane.b32.xlu0 %v552, 32
        %v1211 = vpop.permute.xlu0 %1210
        %1212 = vrot.lane.b32.xlu0 %v555, 32
        %v1213 = vpop.permute.xlu0 %1212
        %1214 = vrot.lane.b32.xlu0 %v557, 32
        %v1215 = vpop.permute.xlu0 %1214
        %1216 = vrot.lane.b32.xlu0 %v856, 32
        %v1217 = vpop.permute.xlu0 %1216
        %1218 = vrot.lane.b32.xlu0 %v858, 32
        %v1219 = vpop.permute.xlu0 %1218
        %1220 = vrot.lane.b32.xlu0 %v1157, 32
        %v1221 = vpop.permute.xlu0 %1220
        %1222 = vrot.lane.b32.xlu0 %v1159, 32
        %v1223 = vpop.permute.xlu0 %1222
        %vm1256 = vcmask 31744
        %v1257 = vsel %vm1256, %v198, %v382
        %v1258 = vsel %vm1256, %v199, %v384
        %v1259 = vsel %vm1256, %v201, %v386
        %v1260 = vsel %vm1256, %v202, %v388
        %v1261 = vsel %vm1256, %v204, %v390
        %v1262 = vsel %vm1256, %v205, %v392
        %v1263 = vsel %vm1256, %v207, %v394
        %v1264 = vsel %vm1256, %v208, %v396
        %v1265 = vsel %vm1256, %v210, %v398
        %v1266 = vsel %vm1256, %v211, %v400
        %v1267 = vsel %vm1256, %v213, %v402
        %v1268 = vsel %vm1256, %v214, %v404
        %v1269 = vsel %vm1256, %v216, %v406
        %v1270 = vsel %vm1256, %v217, %v408
        %v1271 = vsel %vm1256, %v219, %v410
        %v1272 = vsel %vm1256, %v220, %v412
        %v1273 = vsel %vm1256, %v222, %v414
        %v1274 = vsel %vm1256, %v223, %v416
        %v1275 = vsel %vm1256, %v225, %v418
        %v1276 = vsel %vm1256, %v226, %v420
        %v1277 = vsel %vm1256, %v228, %v422
        %v1278 = vsel %vm1256, %v229, %v424
        %v1279 = vsel %vm1256, %v231, %v426
        %v1280 = vsel %vm1256, %v232, %v428
        %v1281 = vsel %vm1256, %v234, %v430
        %v1282 = vsel %vm1256, %v235, %v432
        %v1283 = vsel %vm1256, %v237, %v434
        %v1284 = vsel %vm1256, %v238, %v436
        %v1285 = vsel %vm1256, %v240, %v438
        %v1286 = vsel %vm1256, %v241, %v440
        %v1287 = vsel %vm1256, %v243, %v442
        %v1288 = vsel %vm1256, %v244, %v444
        %vm1289 = vcmask 64512
        %v1290 = vsel %vm1289, %v1257, %v559
        %v1291 = vsel %vm1289, %v1258, %v561
        %v1292 = vsel %vm1289, %v1259, %v563
        %v1293 = vsel %vm1289, %v1260, %v565
        %v1294 = vsel %vm1289, %v1261, %v567
        %v1295 = vsel %vm1289, %v1262, %v569
        %v1296 = vsel %vm1289, %v1263, %v571
        %v1297 = vsel %vm1289, %v1264, %v573
        %v1298 = vsel %vm1289, %v1265, %v575
        %v1299 = vsel %vm1289, %v1266, %v577
        %v1300 = vsel %vm1289, %v1267, %v579
        %v1301 = vsel %vm1289, %v1268, %v581
        %v1302 = vsel %vm1289, %v1269, %v583
        %v1303 = vsel %vm1289, %v1270, %v585
        %v1304 = vsel %vm1289, %v1271, %v587
        %v1305 = vsel %vm1289, %v1272, %v589
        %v1306 = vsel %vm1289, %v1273, %v591
        %v1307 = vsel %vm1289, %v1274, %v593
        %v1308 = vsel %vm1289, %v1275, %v595
        %v1309 = vsel %vm1289, %v1276, %v597
        %v1310 = vsel %vm1289, %v1277, %v599
        %v1311 = vsel %vm1289, %v1278, %v601
        %v1312 = vsel %vm1289, %v1279, %v603
        %v1313 = vsel %vm1289, %v1280, %v605
        %v1314 = vsel %vm1289, %v1281, %v607
        %v1315 = vsel %vm1289, %v1282, %v609
        %v1316 = vsel %vm1289, %v1283, %v611
        %v1317 = vsel %vm1289, %v1284, %v613
        %v1318 = vsel %vm1289, %v1285, %v615
        %v1319 = vsel %vm1289, %v1286, %v617
        %v1320 = vsel %vm1289, %v1287, %v619
        %v1321 = vsel %vm1289, %v1288, %v621
        %vm1322 = vcmask 97280
        %v1323 = vsel %vm1322, %v1290, %v657
        %v1324 = vsel %vm1322, %v1291, %v659
        %v1325 = vsel %vm1322, %v1292, %v661
        %v1326 = vsel %vm1322, %v1293, %v663
        %v1327 = vsel %vm1322, %v1294, %v665
        %v1328 = vsel %vm1322, %v1295, %v667
        %v1329 = vsel %vm1322, %v1296, %v669
        %v1330 = vsel %vm1322, %v1297, %v671
        %v1331 = vsel %vm1322, %v1298, %v673
        %v1332 = vsel %vm1322, %v1299, %v675
        %v1333 = vsel %vm1322, %v1300, %v677
        %v1334 = vsel %vm1322, %v1301, %v679
        %v1335 = vsel %vm1322, %v1302, %v681
        %v1336 = vsel %vm1322, %v1303, %v683
        %v1337 = vsel %vm1322, %v1304, %v685
        %v1338 = vsel %vm1322, %v1305, %v687
        %v1339 = vsel %vm1322, %v1306, %v689
        %v1340 = vsel %vm1322, %v1307, %v691
        %v1341 = vsel %vm1322, %v1308, %v693
        %v1342 = vsel %vm1322, %v1309, %v695
        %v1343 = vsel %vm1322, %v1310, %v697
        %v1344 = vsel %vm1322, %v1311, %v699
        %v1345 = vsel %vm1322, %v1312, %v701
        %v1346 = vsel %vm1322, %v1313, %v703
        %v1347 = vsel %vm1322, %v1314, %v705
        %v1348 = vsel %vm1322, %v1315, %v707
        %v1349 = vsel %vm1322, %v1316, %v709
        %v1350 = vsel %vm1322, %v1317, %v711
        %v1351 = vsel %vm1322, %v1318, %v713
        %v1352 = vsel %vm1322, %v1319, %v715
        %v1353 = vsel %vm1322, %v1320, %v717
        %v1354 = vsel %vm1322, %v1321, %v719
        %vm1355 = vcmask 130048
        %v1356 = vsel %vm1355, %v1323, %v759
        %v1357 = vsel %vm1355, %v1324, %v761
        %v1358 = vsel %vm1355, %v1325, %v763
        %v1359 = vsel %vm1355, %v1326, %v765
        %v1360 = vsel %vm1355, %v1327, %v767
        %v1361 = vsel %vm1355, %v1328, %v769
        %v1362 = vsel %vm1355, %v1329, %v771
        %v1363 = vsel %vm1355, %v1330, %v773
        %v1364 = vsel %vm1355, %v1331, %v775
        %v1365 = vsel %vm1355, %v1332, %v777
        %v1366 = vsel %vm1355, %v1333, %v779
        %v1367 = vsel %vm1355, %v1334, %v781
        %v1368 = vsel %vm1355, %v1335, %v783
        %v1369 = vsel %vm1355, %v1336, %v785
        %v1370 = vsel %vm1355, %v1337, %v787
        %v1371 = vsel %vm1355, %v1338, %v789
        %v1372 = vsel %vm1355, %v1339, %v791
        %v1373 = vsel %vm1355, %v1340, %v793
        %v1374 = vsel %vm1355, %v1341, %v795
        %v1375 = vsel %vm1355, %v1342, %v797
        %v1376 = vsel %vm1355, %v1343, %v799
        %v1377 = vsel %vm1355, %v1344, %v801
        %v1378 = vsel %vm1355, %v1345, %v803
        %v1379 = vsel %vm1355, %v1346, %v805
        %v1380 = vsel %vm1355, %v1347, %v807
        %v1381 = vsel %vm1355, %v1348, %v809
        %v1382 = vsel %vm1355, %v1349, %v811
        %v1383 = vsel %vm1355, %v1350, %v813
        %v1384 = vsel %vm1355, %v1351, %v815
        %v1385 = vsel %vm1355, %v1352, %v817
        %v1386 = vsel %vm1355, %v1353, %v819
        %v1387 = vsel %vm1355, %v1354, %v821
        %vm1388 = vcmask 162816
        %v1389 = vsel %vm1388, %v1356, %v860
        %v1390 = vsel %vm1388, %v1357, %v862
        %v1391 = vsel %vm1388, %v1358, %v864
        %v1392 = vsel %vm1388, %v1359, %v866
        %v1393 = vsel %vm1388, %v1360, %v868
        %v1394 = vsel %vm1388, %v1361, %v870
        %v1395 = vsel %vm1388, %v1362, %v872
        %v1396 = vsel %vm1388, %v1363, %v874
        %v1397 = vsel %vm1388, %v1364, %v876
        %v1398 = vsel %vm1388, %v1365, %v878
        %v1399 = vsel %vm1388, %v1366, %v880
        %v1400 = vsel %vm1388, %v1367, %v882
        %v1401 = vsel %vm1388, %v1368, %v884
        %v1402 = vsel %vm1388, %v1369, %v886
        %v1403 = vsel %vm1388, %v1370, %v888
        %v1404 = vsel %vm1388, %v1371, %v890
        %v1405 = vsel %vm1388, %v1372, %v892
        %v1406 = vsel %vm1388, %v1373, %v894
        %v1407 = vsel %vm1388, %v1374, %v896
        %v1408 = vsel %vm1388, %v1375, %v898
        %v1409 = vsel %vm1388, %v1376, %v900
        %v1410 = vsel %vm1388, %v1377, %v902
        %v1411 = vsel %vm1388, %v1378, %v904
        %v1412 = vsel %vm1388, %v1379, %v906
        %v1413 = vsel %vm1388, %v1380, %v908
        %v1414 = vsel %vm1388, %v1381, %v910
        %v1415 = vsel %vm1388, %v1382, %v912
        %v1416 = vsel %vm1388, %v1383, %v914
        %v1417 = vsel %vm1388, %v1384, %v916
        %v1418 = vsel %vm1388, %v1385, %v918
        %v1419 = vsel %vm1388, %v1386, %v920
        %v1420 = vsel %vm1388, %v1387, %v922
        %vm1421 = vcmask 195584
        %v1422 = vsel %vm1421, %v1389, %v958
        %v1423 = vsel %vm1421, %v1390, %v960
        %v1424 = vsel %vm1421, %v1391, %v962
        %v1425 = vsel %vm1421, %v1392, %v964
        %v1426 = vsel %vm1421, %v1393, %v966
        %v1427 = vsel %vm1421, %v1394, %v968
        %v1428 = vsel %vm1421, %v1395, %v970
        %v1429 = vsel %vm1421, %v1396, %v972
        %v1430 = vsel %vm1421, %v1397, %v974
        %v1431 = vsel %vm1421, %v1398, %v976
        %v1432 = vsel %vm1421, %v1399, %v978
        %v1433 = vsel %vm1421, %v1400, %v980
        %v1434 = vsel %vm1421, %v1401, %v982
        %v1435 = vsel %vm1421, %v1402, %v984
        %v1436 = vsel %vm1421, %v1403, %v986
        %v1437 = vsel %vm1421, %v1404, %v988
        %v1438 = vsel %vm1421, %v1405, %v990
        %v1439 = vsel %vm1421, %v1406, %v992
        %v1440 = vsel %vm1421, %v1407, %v994
        %v1441 = vsel %vm1421, %v1408, %v996
        %v1442 = vsel %vm1421, %v1409, %v998
        %v1443 = vsel %vm1421, %v1410, %v1000
        %v1444 = vsel %vm1421, %v1411, %v1002
        %v1445 = vsel %vm1421, %v1412, %v1004
        %v1446 = vsel %vm1421, %v1413, %v1006
        %v1447 = vsel %vm1421, %v1414, %v1008
        %v1448 = vsel %vm1421, %v1415, %v1010
        %v1449 = vsel %vm1421, %v1416, %v1012
        %v1450 = vsel %vm1421, %v1417, %v1014
        %v1451 = vsel %vm1421, %v1418, %v1016
        %v1452 = vsel %vm1421, %v1419, %v1018
        %v1453 = vsel %vm1421, %v1420, %v1020
        %vm1454 = vcmask 228352
        %v1455 = vsel %vm1454, %v1422, %v1060
        %v1456 = vsel %vm1454, %v1423, %v1062
        %v1457 = vsel %vm1454, %v1424, %v1064
        %v1458 = vsel %vm1454, %v1425, %v1066
        %v1459 = vsel %vm1454, %v1426, %v1068
        %v1460 = vsel %vm1454, %v1427, %v1070
        %v1461 = vsel %vm1454, %v1428, %v1072
        %v1462 = vsel %vm1454, %v1429, %v1074
        %v1463 = vsel %vm1454, %v1430, %v1076
        %v1464 = vsel %vm1454, %v1431, %v1078
        %v1465 = vsel %vm1454, %v1432, %v1080
        %v1466 = vsel %vm1454, %v1433, %v1082
        %v1467 = vsel %vm1454, %v1434, %v1084
        %v1468 = vsel %vm1454, %v1435, %v1086
        %v1469 = vsel %vm1454, %v1436, %v1088
        %v1470 = vsel %vm1454, %v1437, %v1090
        %v1471 = vsel %vm1454, %v1438, %v1092
        %v1472 = vsel %vm1454, %v1439, %v1094
        %v1473 = vsel %vm1454, %v1440, %v1096
        %v1474 = vsel %vm1454, %v1441, %v1098
        %v1475 = vsel %vm1454, %v1442, %v1100
        %v1476 = vsel %vm1454, %v1443, %v1102
        %v1477 = vsel %vm1454, %v1444, %v1104
        %v1478 = vsel %vm1454, %v1445, %v1106
        %v1479 = vsel %vm1454, %v1446, %v1108
        %v1480 = vsel %vm1454, %v1447, %v1110
        %v1481 = vsel %vm1454, %v1448, %v1112
        %v1482 = vsel %vm1454, %v1449, %v1114
        %v1483 = vsel %vm1454, %v1450, %v1116
        %v1484 = vsel %vm1454, %v1451, %v1118
        %v1485 = vsel %vm1454, %v1452, %v1120
        %v1486 = vsel %vm1454, %v1453, %v1122
        %vm1487 = vcmask 261120
        %v1488 = vsel %vm1487, %v1455, %v1161
        %v1489 = vsel %vm1487, %v1456, %v1163
        %v1490 = vsel %vm1487, %v1457, %v1165
        %v1491 = vsel %vm1487, %v1458, %v1167
        %v1492 = vsel %vm1487, %v1459, %v1169
        %v1493 = vsel %vm1487, %v1460, %v1171
        %v1494 = vsel %vm1487, %v1461, %v1173
        %v1495 = vsel %vm1487, %v1462, %v1175
        %v1496 = vsel %vm1487, %v1463, %v1177
        %v1497 = vsel %vm1487, %v1464, %v1179
        %v1498 = vsel %vm1487, %v1465, %v1181
        %v1499 = vsel %vm1487, %v1466, %v1183
        %v1500 = vsel %vm1487, %v1467, %v1185
        %v1501 = vsel %vm1487, %v1468, %v1187
        %v1502 = vsel %vm1487, %v1469, %v1189
        %v1503 = vsel %vm1487, %v1470, %v1191
        %v1504 = vsel %vm1487, %v1471, %v1193
        %v1505 = vsel %vm1487, %v1472, %v1195
        %v1506 = vsel %vm1487, %v1473, %v1197
        %v1507 = vsel %vm1487, %v1474, %v1199
        %v1508 = vsel %vm1487, %v1475, %v1201
        %v1509 = vsel %vm1487, %v1476, %v1203
        %v1510 = vsel %vm1487, %v1477, %v1205
        %v1511 = vsel %vm1487, %v1478, %v1207
        %v1512 = vsel %vm1487, %v1479, %v1209
        %v1513 = vsel %vm1487, %v1480, %v1211
        %v1514 = vsel %vm1487, %v1481, %v1213
        %v1515 = vsel %vm1487, %v1482, %v1215
        %v1516 = vsel %vm1487, %v1483, %v1217
        %v1517 = vsel %vm1487, %v1484, %v1219
        %v1518 = vsel %vm1487, %v1485, %v1221
        %v1519 = vsel %vm1487, %v1486, %v1223
        %v1520 = vld [vmem:[%s1] sm:$0xff]
        %v1521 = vld [vmem:[%s1 + $0x8] sm:$0xff]
        %v1522 = vld [vmem:[%s1 + $0x10] sm:$0xff]
        %v1523 = vld [vmem:[%s1 + $0x18] sm:$0xff]
        %v1524 = vld [vmem:[%s1 + $0x20] sm:$0xf]
        %v1525 = vld [vmem:[%s2] sm:$0x1]
        %v1527 = vlaneseq
        %v1528 = vshrl.u32 %v1527, 7
        %v1529 = vsub.s32 0, %v1528
        %v1530 = vrot.slane %v1525, %v1529
        %vm1532 = vcmask 293888
        %v1534 = vsel %vm1532, %v1488, 0
        %v1537 = vsel %vm1532, %v1489, 0
        %v1540 = vsel %vm1532, %v1490, 0
        %v1543 = vsel %vm1532, %v1491, 0
        %v1546 = vsel %vm1532, %v1492, 0
        %v1549 = vsel %vm1532, %v1493, 0
        %v1552 = vsel %vm1532, %v1494, 0
        %v1555 = vsel %vm1532, %v1495, 0
        %v1558 = vsel %vm1532, %v1496, 0
        %v1561 = vsel %vm1532, %v1497, 0
        %v1564 = vsel %vm1532, %v1498, 0
        %v1567 = vsel %vm1532, %v1499, 0
        %v1570 = vsel %vm1532, %v1500, 0
        %v1573 = vsel %vm1532, %v1501, 0
        %v1576 = vsel %vm1532, %v1502, 0
        %v1579 = vsel %vm1532, %v1503, 0
        %v1582 = vsel %vm1532, %v1504, 0
        %v1585 = vsel %vm1532, %v1505, 0
        %v1588 = vsel %vm1532, %v1506, 0
        %v1591 = vsel %vm1532, %v1507, 0
        %v1594 = vsel %vm1532, %v1508, 0
        %v1597 = vsel %vm1532, %v1509, 0
        %v1600 = vsel %vm1532, %v1510, 0
        %v1603 = vsel %vm1532, %v1511, 0
        %v1606 = vsel %vm1532, %v1512, 0
        %v1609 = vsel %vm1532, %v1513, 0
        %v1612 = vsel %vm1532, %v1514, 0
        %v1615 = vsel %vm1532, %v1515, 0
        %v1618 = vsel %vm1532, %v1516, 0
        %v1621 = vsel %vm1532, %v1517, 0
        %v1624 = vsel %vm1532, %v1518, 0
        %v1627 = vsel %vm1532, %v1519, 0
        %vm1629 = vcmask 1043456
        %v1631 = vsel %vm1629, %v1524, 0
        %1633 = vmatprep.subr.mxu0 0.0
        %1634 = vmatpush1.msra.mxu0 %v1520
        %1635 = vmatprep.subr.mxu0 0.0
        %1636 = vmatpush1.msra.mxu0 %v1521
        %1637 = vmatprep.subr.mxu0 0.0
        %1638 = vmatpush1.msra.mxu0 %v1522
        %1639 = vmatprep.subr.mxu0 0.0
        %1640 = vmatpush1.msra.mxu0 %v1523
        %1641 = vmatprep.subr.mxu0 0.0
        %1642 = vmatpush1.msra.mxu0 %v1631
        %1643 = vmatprep.subr.mxu0 0.0
        %1644 = vmatpush1.msra.mxu0 0.0
        %1645 = vmatprep.subr.mxu0 0.0
        %1646 = vmatpush1.msra.mxu0 0.0
        %1647 = vmatprep.subr.mxu0 0.0
        %1648 = vmatpush1.msra.mxu0 0.0
        %1649 = vmatprep.subr.mxu0 0.0
        %1650 = vmatpush1.msra.mxu0 0.0
        %1651 = vmatprep.subr.mxu0 0.0
        %1652 = vmatpush1.msra.mxu0 0.0
        %1653 = vmatprep.subr.mxu0 0.0
        %1654 = vmatpush1.msra.mxu0 0.0
        %1655 = vmatprep.subr.mxu0 0.0
        %1656 = vmatpush1.msra.mxu0 0.0
        %1657 = vmatprep.subr.mxu0 0.0
        %1658 = vmatpush1.msra.mxu0 0.0
        %1659 = vmatprep.subr.mxu0 0.0
        %1660 = vmatpush1.msra.mxu0 0.0
        %1661 = vmatprep.subr.mxu0 0.0
        %1662 = vmatpush1.msra.mxu0 0.0
        %1663 = vmatprep.subr.mxu0 0.0
        %1664 = vmatpush1.msra.mxu0 0.0
        %1665 = vmatprep.subr.mxu0 0.0
        %1666 = vmatpush1.msra.mxu0 0.0
        %1667 = vmatprep.subr.mxu0 0.0
        %1668 = vmatpush1.msra.mxu0 0.0
        %1669 = vmatprep.subr.mxu0 0.0
        %1670 = vmatpush1.msra.mxu0 0.0
        %1671 = vmatprep.subr.mxu0 0.0
        %1672 = vmatpush1.msra.mxu0 0.0
        %1673 = vmatprep.subr.mxu0 0.0
        %1674 = vmatpush1.msra.mxu0 0.0
        %1675 = vmatprep.subr.mxu0 0.0
        %1676 = vmatpush1.msra.mxu0 0.0
        %1677 = vmatprep.subr.mxu0 0.0
        %1678 = vmatpush1.msra.mxu0 0.0
        %1679 = vmatprep.subr.mxu0 0.0
        %1680 = vmatpush1.msra.mxu0 0.0
        %1681 = vmatprep.subr.mxu0 0.0
        %1682 = vmatpush1.msra.mxu0 0.0
        %1683 = vmatprep.subr.mxu0 0.0
        %1684 = vmatpush1.msra.mxu0 0.0
        %1685 = vmatprep.subr.mxu0 0.0
        %1686 = vmatpush1.msra.mxu0 0.0
        %1687 = vmatprep.subr.mxu0 0.0
        %1688 = vmatpush1.msra.mxu0 0.0
        %1689 = vmatprep.subr.mxu0 0.0
        %1690 = vmatpush1.msra.mxu0 0.0
        %1691 = vmatprep.subr.mxu0 0.0
        %1692 = vmatpush1.msra.mxu0 0.0
        %1693 = vmatprep.subr.mxu0 0.0
        %1694 = vmatpush1.msra.mxu0 0.0
        %1695 = vmatprep.subr.mxu0 0.0
        %1696 = vmatpush1.msra.mxu0 0.0
        %1697 = vmatprep.mubr.f32.mxu0 0.0
        %1698 = vmatmul.mubr.f32.gmra.mrb[0].mxu0 %v1534
        %v1699 = vpop.f32.mrb[0].mxu0
        %v1700 = vadd.f32 %v1530, %v1699
        %v1701 = vpop.f32.mrb[0].mxu0
        %1702 = vmatprep.mubr.f32.mxu0 0.0
        %1703 = vmatmul.mubr.f32.gmra.mrb[0].mxu0 %v1537
        %v1704 = vpop.f32.mrb[0].mxu0
        %v1705 = vadd.f32 %v1530, %v1704
        %v1706 = vpop.f32.mrb[0].mxu0
        %1707 = vmatprep.mubr.f32.mxu0 0.0
        %1708 = vmatmul.mubr.f32.gmra.mrb[0].mxu0 %v1540
        %v1709 = vpop.f32.mrb[0].mxu0
        %v1710 = vadd.f32 %v1530, %v1709
        %v1711 = vpop.f32.mrb[0].mxu0
        %1712 = vmatprep.mubr.f32.mxu0 0.0
        %1713 = vmatmul.mubr.f32.gmra.mrb[0].mxu0 %v1543
        %v1714 = vpop.f32.mrb[0].mxu0
        %v1715 = vadd.f32 %v1530, %v1714
        %v1716 = vpop.f32.mrb[0].mxu0
        %1717 = vmatprep.mubr.f32.mxu0 0.0
        %1718 = vmatmul.mubr.f32.gmra.mrb[0].mxu0 %v1546
        %v1719 = vpop.f32.mrb[0].mxu0
        %v1720 = vadd.f32 %v1530, %v1719
        %v1721 = vpop.f32.mrb[0].mxu0
        %1722 = vmatprep.mubr.f32.mxu0 0.0
        %1723 = vmatmul.mubr.f32.gmra.mrb[0].mxu0 %v1549
        %v1724 = vpop.f32.mrb[0].mxu0
        %v1725 = vadd.f32 %v1530, %v1724
        %v1726 = vpop.f32.mrb[0].mxu0
        %1727 = vmatprep.mubr.f32.mxu0 0.0
        %1728 = vmatmul.mubr.f32.gmra.mrb[0].mxu0 %v1552
        %v1729 = vpop.f32.mrb[0].mxu0
        %v1730 = vadd.f32 %v1530, %v1729
        %v1731 = vpop.f32.mrb[0].mxu0
        %1732 = vmatprep.mubr.f32.mxu0 0.0
        %1733 = vmatmul.mubr.f32.gmra.mrb[0].mxu0 %v1555
        %v1734 = vpop.f32.mrb[0].mxu0
        %v1735 = vadd.f32 %v1530, %v1734
        %v1736 = vpop.f32.mrb[0].mxu0
        %1737 = vmatprep.mubr.f32.mxu0 0.0
        %1738 = vmatmul.mubr.f32.gmra.mrb[0].mxu0 %v1558
        %v1739 = vpop.f32.mrb[0].mxu0
        %v1740 = vadd.f32 %v1530, %v1739
        %v1741 = vpop.f32.mrb[0].mxu0
        %1742 = vmatprep.mubr.f32.mxu0 0.0
        %1743 = vmatmul.mubr.f32.gmra.mrb[0].mxu0 %v1561
        %v1744 = vpop.f32.mrb[0].mxu0
        %v1745 = vadd.f32 %v1530, %v1744
        %v1746 = vpop.f32.mrb[0].mxu0
        %1747 = vmatprep.mubr.f32.mxu0 0.0
        %1748 = vmatmul.mubr.f32.gmra.mrb[0].mxu0 %v1564
        %v1749 = vpop.f32.mrb[0].mxu0
        %v1750 = vadd.f32 %v1530, %v1749
        %v1751 = vpop.f32.mrb[0].mxu0
        %1752 = vmatprep.mubr.f32.mxu0 0.0
        %1753 = vmatmul.mubr.f32.gmra.mrb[0].mxu0 %v1567
        %v1754 = vpop.f32.mrb[0].mxu0
        %v1755 = vadd.f32 %v1530, %v1754
        %v1756 = vpop.f32.mrb[0].mxu0
        %1757 = vmatprep.mubr.f32.mxu0 0.0
        %1758 = vmatmul.mubr.f32.gmra.mrb[0].mxu0 %v1570
        %v1759 = vpop.f32.mrb[0].mxu0
        %v1760 = vadd.f32 %v1530, %v1759
        %v1761 = vpop.f32.mrb[0].mxu0
        %1762 = vmatprep.mubr.f32.mxu0 0.0
        %1763 = vmatmul.mubr.f32.gmra.mrb[0].mxu0 %v1573
        %v1764 = vpop.f32.mrb[0].mxu0
        %v1765 = vadd.f32 %v1530, %v1764
        %v1766 = vpop.f32.mrb[0].mxu0
        %1767 = vmatprep.mubr.f32.mxu0 0.0
        %1768 = vmatmul.mubr.f32.gmra.mrb[0].mxu0 %v1576
        %v1769 = vpop.f32.mrb[0].mxu0
        %v1770 = vadd.f32 %v1530, %v1769
        %v1771 = vpop.f32.mrb[0].mxu0
        %1772 = vmatprep.mubr.f32.mxu0 0.0
        %1773 = vmatmul.mubr.f32.gmra.mrb[0].mxu0 %v1579
        %v1774 = vpop.f32.mrb[0].mxu0
        %v1775 = vadd.f32 %v1530, %v1774
        %v1776 = vpop.f32.mrb[0].mxu0
        %1777 = vmatprep.mubr.f32.mxu0 0.0
        %1778 = vmatmul.mubr.f32.gmra.mrb[0].mxu0 %v1582
        %v1779 = vpop.f32.mrb[0].mxu0
        %v1780 = vadd.f32 %v1530, %v1779
        %v1781 = vpop.f32.mrb[0].mxu0
        %1782 = vmatprep.mubr.f32.mxu0 0.0
        %1783 = vmatmul.mubr.f32.gmra.mrb[0].mxu0 %v1585
        %v1784 = vpop.f32.mrb[0].mxu0
        %v1785 = vadd.f32 %v1530, %v1784
        %v1786 = vpop.f32.mrb[0].mxu0
        %1787 = vmatprep.mubr.f32.mxu0 0.0
        %1788 = vmatmul.mubr.f32.gmra.mrb[0].mxu0 %v1588
        %v1789 = vpop.f32.mrb[0].mxu0
        %v1790 = vadd.f32 %v1530, %v1789
        %v1791 = vpop.f32.mrb[0].mxu0
        %1792 = vmatprep.mubr.f32.mxu0 0.0
        %1793 = vmatmul.mubr.f32.gmra.mrb[0].mxu0 %v1591
        %v1794 = vpop.f32.mrb[0].mxu0
        %v1795 = vadd.f32 %v1530, %v1794
        %v1796 = vpop.f32.mrb[0].mxu0
        %1797 = vmatprep.mubr.f32.mxu0 0.0
        %1798 = vmatmul.mubr.f32.gmra.mrb[0].mxu0 %v1594
        %v1799 = vpop.f32.mrb[0].mxu0
        %v1800 = vadd.f32 %v1530, %v1799
        %v1801 = vpop.f32.mrb[0].mxu0
        %1802 = vmatprep.mubr.f32.mxu0 0.0
        %1803 = vmatmul.mubr.f32.gmra.mrb[0].mxu0 %v1597
        %v1804 = vpop.f32.mrb[0].mxu0
        %v1805 = vadd.f32 %v1530, %v1804
        %v1806 = vpop.f32.mrb[0].mxu0
        %1807 = vmatprep.mubr.f32.mxu0 0.0
        %1808 = vmatmul.mubr.f32.gmra.mrb[0].mxu0 %v1600
        %v1809 = vpop.f32.mrb[0].mxu0
        %v1810 = vadd.f32 %v1530, %v1809
        %v1811 = vpop.f32.mrb[0].mxu0
        %1812 = vmatprep.mubr.f32.mxu0 0.0
        %1813 = vmatmul.mubr.f32.gmra.mrb[0].mxu0 %v1603
        %v1814 = vpop.f32.mrb[0].mxu0
        %v1815 = vadd.f32 %v1530, %v1814
        %v1816 = vpop.f32.mrb[0].mxu0
        %1817 = vmatprep.mubr.f32.mxu0 0.0
        %1818 = vmatmul.mubr.f32.gmra.mrb[0].mxu0 %v1606
        %v1819 = vpop.f32.mrb[0].mxu0
        %v1820 = vadd.f32 %v1530, %v1819
        %v1821 = vpop.f32.mrb[0].mxu0
        %1822 = vmatprep.mubr.f32.mxu0 0.0
        %1823 = vmatmul.mubr.f32.gmra.mrb[0].mxu0 %v1609
        %v1824 = vpop.f32.mrb[0].mxu0
        %v1825 = vadd.f32 %v1530, %v1824
        %v1826 = vpop.f32.mrb[0].mxu0
        %1827 = vmatprep.mubr.f32.mxu0 0.0
        %1828 = vmatmul.mubr.f32.gmra.mrb[0].mxu0 %v1612
        %v1829 = vpop.f32.mrb[0].mxu0
        %v1830 = vadd.f32 %v1530, %v1829
        %v1831 = vpop.f32.mrb[0].mxu0
        %1832 = vmatprep.mubr.f32.mxu0 0.0
        %1833 = vmatmul.mubr.f32.gmra.mrb[0].mxu0 %v1615
        %v1834 = vpop.f32.mrb[0].mxu0
        %v1835 = vadd.f32 %v1530, %v1834
        %v1836 = vpop.f32.mrb[0].mxu0
        %1837 = vmatprep.mubr.f32.mxu0 0.0
        %1838 = vmatmul.mubr.f32.gmra.mrb[0].mxu0 %v1618
        %v1839 = vpop.f32.mrb[0].mxu0
        %v1840 = vadd.f32 %v1530, %v1839
        %v1841 = vpop.f32.mrb[0].mxu0
        %1842 = vmatprep.mubr.f32.mxu0 0.0
        %1843 = vmatmul.mubr.f32.gmra.mrb[0].mxu0 %v1621
        %v1844 = vpop.f32.mrb[0].mxu0
        %v1845 = vadd.f32 %v1530, %v1844
        %v1846 = vpop.f32.mrb[0].mxu0
        %1847 = vmatprep.mubr.f32.mxu0 0.0
        %1848 = vmatmul.mubr.f32.gmra.mrb[0].mxu0 %v1624
        %v1849 = vpop.f32.mrb[0].mxu0
        %v1850 = vadd.f32 %v1530, %v1849
        %v1851 = vpop.f32.mrb[0].mxu0
        %1852 = vmatprep.mubr.f32.mxu0 0.0
        %1853 = vmatmul.mubr.f32.gmra.mrb[0].mxu0 %v1627
        %v1854 = vpop.f32.mrb[0].mxu0
        %v1855 = vadd.f32 %v1530, %v1854
        %v1856 = vpop.f32.mrb[0].mxu0
        %1857 = vdwg.mxu0
        %1858 = vst [vmem:[%s187] sm:$0xff] %v1700
        %1859 = vst [vmem:[%s187 + $0x8] sm:$0xff] %v1705
        %1860 = vst [vmem:[%s187 + $0x10] sm:$0xff] %v1710
        %1861 = vst [vmem:[%s187 + $0x18] sm:$0xff] %v1715
        %1862 = vst [vmem:[%s187 + $0x20] sm:$0xff] %v1720
        %1863 = vst [vmem:[%s187 + $0x28] sm:$0xff] %v1725
        %1864 = vst [vmem:[%s187 + $0x30] sm:$0xff] %v1730
        %1865 = vst [vmem:[%s187 + $0x38] sm:$0xff] %v1735
        %1866 = vst [vmem:[%s187 + $0x40] sm:$0xff] %v1740
        %1867 = vst [vmem:[%s187 + $0x48] sm:$0xff] %v1745
        %1868 = vst [vmem:[%s187 + $0x50] sm:$0xff] %v1750
        %1869 = vst [vmem:[%s187 + $0x58] sm:$0xff] %v1755
        %1870 = vst [vmem:[%s187 + $0x60] sm:$0xff] %v1760
        %1871 = vst [vmem:[%s187 + $0x68] sm:$0xff] %v1765
        %1872 = vst [vmem:[%s187 + $0x70] sm:$0xff] %v1770
        %1873 = vst [vmem:[%s187 + $0x78] sm:$0xff] %v1775
        %1874 = vst [vmem:[%s187 + $0x80] sm:$0xff] %v1780
        %1875 = vst [vmem:[%s187 + $0x88] sm:$0xff] %v1785
        %1876 = vst [vmem:[%s187 + $0x90] sm:$0xff] %v1790
        %1877 = vst [vmem:[%s187 + $0x98] sm:$0xff] %v1795
        %1878 = vst [vmem:[%s187 + $0xa0] sm:$0xff] %v1800
        %1879 = vst [vmem:[%s187 + $0xa8] sm:$0xff] %v1805
        %1880 = vst [vmem:[%s187 + $0xb0] sm:$0xff] %v1810
        %1881 = vst [vmem:[%s187 + $0xb8] sm:$0xff] %v1815
        %1882 = vst [vmem:[%s187 + $0xc0] sm:$0xff] %v1820
        %1883 = vst [vmem:[%s187 + $0xc8] sm:$0xff] %v1825
        %1884 = vst [vmem:[%s187 + $0xd0] sm:$0xff] %v1830
        %1885 = vst [vmem:[%s187 + $0xd8] sm:$0xff] %v1835
        %1886 = vst [vmem:[%s187 + $0xe0] sm:$0xff] %v1840
        %1887 = vst [vmem:[%s187 + $0xe8] sm:$0xff] %v1845
        %1888 = vst [vmem:[%s187 + $0xf0] sm:$0xff] %v1850
        %1889 = vst [vmem:[%s187 + $0xf8] sm:$0xff] %v1855
        %s1890 = sand.u32 %s109, 1
        %s1891 = scalar_lea.sflag [#allocation3], %s1890
        %s1892 = sand.u32 %s109, 1
        %s1893 = smul.addr %s1892, 256
        %s1894 = scalar_lea.vmem [#allocation2], %s1893
        // Predicated region
        $region33: #{tpu_custom_call.1} parent=31 // pred_check
          %p1895 = pneg %p119
        $region34: #{tpu_custom_call.1} parent=31 // pred_check_branch
          %1897 = sbr.rel (%p1895) target = $region36
        $region35: #{tpu_custom_call.1} parent=31 // pred_region
          %s1898 = smul.u32 16, %s22
          %s1900 = ssub.s32 4096, 4096
          %1901 = vsyncadd %s1891, %s1900
          %s1902 = smul.addr %s1898, 2
          %s1903 = smul.addr %s21, 32
          %s1904 = sadd.s32 %s1902, %s1903
          %s1905 = smul.addr %s1904, 128
          %s1906 = scalar_lea.hbm %s3, %s1905
          %s1907 = sshll.u32 %s1894, 4
          %s1908 = int_to_ptr.vmem [resolvable:$true] %s1907
          %1913 = dma.vmem_to_hbm [thread:$0]  %s1908, 4096, %s1906, %s1891, 128, 128, 8
        $region36: #{tpu_custom_call.1} parent=31 // pred_fallthru
          _
      $region32: #{tpu_custom_call.1} parent=5 // pred_fallthru
        _
      %p1914 = scmp.le.s32.totalorder 2, %s12
      // Predicated region
      $region37: #{tpu_custom_call.1} parent=5 // pred_check
        %p1915 = pneg %p1914
      $region38: #{tpu_custom_call.1} parent=5 // pred_check_branch
        %1917 = sbr.rel (%p1915) target = $region40
      $region39: #{tpu_custom_call.1} parent=5 // pred_region
        %s1918 = ssub.s32 %s12, 2
        // Predicated region
        $region41: #{tpu_custom_call.1} parent=39 // pred_check
          %p1919 = pneg %p125
        $region42: #{tpu_custom_call.1} parent=39 // pred_check_branch
          %1921 = sbr.rel (%p1919) target = $region44
        $region43: #{tpu_custom_call.1} parent=39 // pred_region
          %s1922 = sand.u32 %s110, 1
          %s1923 = scalar_lea.sflag [#allocation3], %s1922
          %s1924 = sand.u32 %s110, 1
          %s1925 = smul.addr %s1924, 256
          %s1926 = scalar_lea.vmem [#allocation2], %s1925
          %1927 = dma.done %s1923, 4096
        $region44: #{tpu_custom_call.1} parent=39 // pred_fallthru
          _
      $region40: #{tpu_custom_call.1} parent=5 // pred_fallthru
        _
    $region6: #{tpu_custom_call.1} parent=1 // loop_footer
      %s16 = sadd.s32 1, %s12
    $region7: #{tpu_custom_call.1} parent=1 // loop_footer_branch
      %11 = sbr.rel target = $region3
    $region8: #{tpu_custom_call.1} parent=1 // loop_exit
      _
    %1928 = vsyncpa [#allocation3], 1
    %s1929 = scalar_lea.sflag [#allocation3], 1
    %1930 = vsyncpa %s1929, 1

</llo_original>
